<compile_context>
chip_gen: v7x
topology: tpu7x:2x2x1
jax: 0.10.0
libtpu: 0.0.40
codegen_flags: <defaults>
</compile_context>

<pallas_src>
import functools

import jax
import jax.numpy as jnp
from jax.experimental import pallas as pl
from jax.experimental.pallas import tpu as pltpu


def qwen2_mlp_nd_kernel(x_ref, wg_ref, wu_ref, wd_ref, out_ref, imp_ref, acc_ref):
    # x_ref:   (1, ts, H)    activation tile for (batch b, s-tile)
    # wg_ref:  (ti, H)       gate_proj.weight tile (natural [I, H] layout)
    # wu_ref:  (ti, H)       up_proj.weight tile   (natural [I, H] layout)
    # wd_ref:  (H, ti)       down_proj.weight tile (natural [H, I] layout)
    # out_ref: (1, ts, H)    output tile for (b, s-tile)
    # imp_ref: (1, 1, 1, I)  per-(b, s-tile) partial sum_s inter^2 (carry-free)
    # acc_ref: (ts, H) f32   scratch accumulator for the down projection
    i = pl.program_id(2)
    n_i = pl.num_programs(2)
    ti = wg_ref.shape[0]

    x = x_ref[0]                                                  # (ts, H)

    # Contract over H against the naturally-laid-out [ti, H] weight tiles
    # (i.e. x @ W_tile^T), back-to-back so x is reused while resident.
    dn = (((1,), (1,)), ((), ()))
    g = jax.lax.dot_general(x, wg_ref[...], dn,
                            preferred_element_type=jnp.float32)   # (ts, ti)
    u = jax.lax.dot_general(x, wu_ref[...], dn,
                            preferred_element_type=jnp.float32)   # (ts, ti)

    # Full-precision SiLU(gate) * up; impacts use this f32 value, the down
    # projection uses the model-dtype cast (feeds MXU in bf16 for bf16 models).
    inter_f32 = (g * jax.nn.sigmoid(g)) * u                       # (ts, ti) f32
    inter = inter_f32.astype(x.dtype)                             # (ts, ti)

    # Partial down projection for this i-tile: (ts, ti) x (H, ti)^T -> (ts, H).
    part = jax.lax.dot_general(inter, wd_ref[...], dn,
                               preferred_element_type=jnp.float32)

    @pl.when(i == 0)
    def _():
        acc_ref[...] = part

    @pl.when(i > 0)
    def _():
        acc_ref[...] += part

    @pl.when(i == n_i - 1)
    def _():
        out_ref[0] = acc_ref[...].astype(out_ref.dtype)

    # Carry-free per-(b, s-tile) impacts partials: each i-step fills its own
    # column slice of the resident block.  The cross-s reduce, * sum_h(Wu^2)
    # and sqrt happen in the wrapper (keeps the s axis megacore-parallel).
    sq = jnp.sum(inter_f32 * inter_f32, axis=0, keepdims=True)    # (1, ti)
    col = pl.multiple_of(i * ti, 128)
    imp_ref[0, 0, :, pl.ds(col, ti)] = sq


def _tpu_vmem_capacity_bytes():
    try:
        return int(pltpu.get_tpu_info().vmem_capacity_bytes)
    except Exception:
        return 64 << 20  # conservative (v7x-sized) fallback


def _pick_tile(dim, target, align):
    """Largest multiple of `align` that is <= min(target, dim) and divides dim."""
    t = min(target, dim)
    t = (t // align) * align
    while t >= align:
        if dim % t == 0:
            return t
        t -= align
    return dim  # fall back to the full (unblocked) extent


@functools.partial(jax.jit, static_argnames=("ts", "ti", "vmem_limit"))
def _qwen2_mlp_nd_impl(hidden_state, gate_w, up_w, down_w, *, ts, ti, vmem_limit):
    B, S, H = hidden_state.shape
    I = gate_w.shape[0]
    n_s, n_i = S // ts, I // ti

    out, imp_partial = pl.pallas_call(
        qwen2_mlp_nd_kernel,
        out_shape=(
            jax.ShapeDtypeStruct((B, S, H), hidden_state.dtype),
            jax.ShapeDtypeStruct((B, n_s, 1, I), jnp.float32),
        ),
        grid_spec=pltpu.PrefetchScalarGridSpec(
            num_scalar_prefetch=0,
            grid=(B, n_s, n_i),
            in_specs=[
                pl.BlockSpec((1, ts, H), lambda b, s, i: (b, s, 0)),   # x
                pl.BlockSpec((ti, H), lambda b, s, i: (i, 0)),         # gate_w [I,H]
                pl.BlockSpec((ti, H), lambda b, s, i: (i, 0)),         # up_w   [I,H]
                pl.BlockSpec((H, ti), lambda b, s, i: (0, i)),         # down_w [H,I]
            ],
            out_specs=[
                pl.BlockSpec((1, ts, H), lambda b, s, i: (b, s, 0)),     # out
                pl.BlockSpec((1, 1, 1, I), lambda b, s, i: (b, s, 0, 0)),  # impacts partials
            ],
            scratch_shapes=[pltpu.VMEM((ts, H), jnp.float32)],
        ),
        compiler_params=pltpu.CompilerParams(
            dimension_semantics=("parallel", "parallel", "arbitrary"),
            vmem_limit_bytes=vmem_limit,
        ),
    )(hidden_state, gate_w, up_w, down_w)

    # Finalize impacts on the host side of the kernel (tiny: B*n_s*I fp32).
    # Hoisted, batch-invariant: sum_h up_w[i, h]^2.
    wu_sq = jnp.sum(up_w.astype(jnp.float32) ** 2, axis=1)          # (I,)
    impacts = jnp.sqrt(imp_partial[:, :, 0, :].sum(axis=1) * wu_sq[None, :])
    return out, impacts


def qwen2_mlp_nd(hidden_state, gate_w, up_w, down_w, *, ts=None, ti=None):
    """hidden_state: [B, S, H]; gate_w/up_w: [I, H]; down_w: [H, I].

    Weights are taken in their natural nn.Linear layouts (no transposes).
    Returns (new_hidden_state [B, S, H], impacts [B, I] float32).
    """
    B, S, H = hidden_state.shape
    I = gate_w.shape[0]
    assert gate_w.shape == (I, H) and up_w.shape == (I, H) and down_w.shape == (H, I)
    assert H % 128 == 0, "hidden size must be a multiple of 128"

    vmem_cap = _tpu_vmem_capacity_bytes()

    if ts is None:
        # 128-MiB parts (v5e/v6e) comfortably fit ts=1024; 64-MiB (v7x) -> 512.
        ts = _pick_tile(S, 1024 if vmem_cap >= (100 << 20) else 512, 8)
    if ti is None:
        ti = _pick_tile(I, 512, 128)
    ts, ti = min(ts, S), min(ti, I)
    assert S % ts == 0 and I % ti == 0, "S/I must be divisible by the tile sizes"
    assert ts % 8 == 0 and (ti % 128 == 0 or ti == I), \
        "tiles must be vreg aligned (ts multiple of 8; ti multiple of 128)"

    # Explicit VMEM budget (double-buffered inputs/outputs + fp32 accumulator),
    # capped below the physical capacity of this TPU generation.
    dsz = hidden_state.dtype.itemsize
    wsz = gate_w.dtype.itemsize
    need = (2 * ts * H * dsz            # x tile
            + 2 * 2 * ti * H * wsz      # gate + up tiles
            + 2 * H * ti * wsz          # down tile
            + 2 * ts * H * dsz          # out tile
            + 2 * I * 4                 # impacts partial block
            + ts * H * 4)               # fp32 accumulator scratch
    cap = max(vmem_cap - (12 << 20), 32 << 20)
    vmem_limit = int(min(max(need * 1.25, 32 << 20), cap))

    return _qwen2_mlp_nd_impl(hidden_state, gate_w, up_w, down_w,
                              ts=ts, ti=ti, vmem_limit=vmem_limit)


def _reference(hidden_state, gate_w, up_w, down_w):
    # Pure-JAX reference mirroring the PyTorch module.
    hp = jax.lax.Precision.HIGHEST
    g = jnp.einsum("bsh,ih->bsi", hidden_state, gate_w, precision=hp)
    u = jnp.einsum("bsh,ih->bsi", hidden_state, up_w, precision=hp)
    inter = jax.nn.silu(g) * u                                    # [B, S, I]
    out = jnp.einsum("bsi,hi->bsh", inter, down_w, precision=hp)  # [B, S, H]
    impacts = jnp.sqrt(
        jnp.sum((inter ** 2).sum(axis=1)[..., None] * (up_w[None] ** 2), axis=-1)
    )                                                             # [B, I]
    return out, impacts


# TODO(synk): the PyTorch module also concatenates impacts across successive
# forward() calls onto self.up_proj.impacts / self.down_proj.impacts; that is
# host-side module state, so this function simply returns impacts per call.

if __name__ == "__main__":
    # Small but tiling-exercising shapes (grid = (2, 2, 2) with ts=128, ti=256).
    B, S, H, I = 2, 256, 256, 512
    key = jax.random.PRNGKey(0)
    kx, kg, ku, kd = jax.random.split(key, 4)

    x = jax.random.normal(kx, (B, S, H), dtype=jnp.float32)
    gate_w = 0.05 * jax.random.normal(kg, (I, H), dtype=jnp.float32)  # gate_proj.weight
    up_w = 0.05 * jax.random.normal(ku, (I, H), dtype=jnp.float32)    # up_proj.weight
    down_w = 0.05 * jax.random.normal(kd, (H, I), dtype=jnp.float32)  # down_proj.weight

    out, impacts = qwen2_mlp_nd(x, gate_w, up_w, down_w, ts=128, ti=256)
    out = jax.block_until_ready(out)
    impacts = jax.block_until_ready(impacts)

    ref_out, ref_imp = _reference(x, gate_w, up_w, down_w)
    assert out.shape == (B, S, H) and impacts.shape == (B, I)
    assert jnp.allclose(out, ref_out, atol=2e-3, rtol=2e-3), \
        float(jnp.max(jnp.abs(out - ref_out)))
    assert jnp.allclose(impacts, ref_imp, atol=2e-3, rtol=2e-3), \
        float(jnp.max(jnp.abs(impacts - ref_imp)))

    # Also exercise the auto-picked (generation-aware) tile path once.
    out2, imp2 = qwen2_mlp_nd(x, gate_w, up_w, down_w)
    jax.block_until_ready(out2)
    assert jnp.allclose(out2, ref_out, atol=2e-3, rtol=2e-3)
    assert jnp.allclose(imp2, ref_imp, atol=2e-3, rtol=2e-3)

    print("KERNEL_OK")
</pallas_src>

<mosaic_0001>
module attributes {stable_mosaic.version = 11 : i64} {
  func.func @qwen2_mlp_nd_kernel(%arg0: i32, %arg1: i32, %arg2: i32, %arg3: memref<1x128x256xf32, #tpu.memory_space<vmem>>, %arg4: memref<256x256xf32, #tpu.memory_space<vmem>>, %arg5: memref<256x256xf32, #tpu.memory_space<vmem>>, %arg6: memref<256x256xf32, #tpu.memory_space<vmem>>, %arg7: memref<1x128x256xf32, #tpu.memory_space<vmem>>, %arg8: memref<1x1x1x512xf32, #tpu.memory_space<vmem>>, %arg9: memref<128x256xf32, #tpu.memory_space<vmem>>) attributes {dimension_semantics = [#tpu.dimension_semantics<parallel>, #tpu.dimension_semantics<parallel>, #tpu.dimension_semantics<arbitrary>], iteration_bounds = array<i64: 2, 2, 2>, scalar_prefetch = 0 : i64, scratch_operands = 1 : i64, tpu.core_type = #tpu.core_type<tc>, window_params = [{transform_indices = @transform_0, window_bounds = array<i64: 1, 128, 256>}, {transform_indices = @transform_1, window_bounds = array<i64: 256, 256>}, {transform_indices = @transform_2, window_bounds = array<i64: 256, 256>}, {transform_indices = @transform_3, window_bounds = array<i64: 256, 256>}, {transform_indices = @transform_4, window_bounds = array<i64: 1, 128, 256>}, {transform_indices = @transform_5, window_bounds = array<i64: 1, 1, 1, 512>}]} {
    %c0 = arith.constant 0 : index
    %c0_0 = arith.constant 0 : index
    %c0_1 = arith.constant 0 : index
    %0 = vector.load %arg3[%c0, %c0_0, %c0_1] : memref<1x128x256xf32, #tpu.memory_space<vmem>>, vector<1x128x256xf32>
    %1 = vector.shape_cast %0 : vector<1x128x256xf32> to vector<128x256xf32>
    %c0_2 = arith.constant 0 : index
    %c0_3 = arith.constant 0 : index
    %2 = vector.load %arg4[%c0_2, %c0_3] : memref<256x256xf32, #tpu.memory_space<vmem>>, vector<256x256xf32>
    %cst = arith.constant dense<0.000000e+00> : vector<128x256xf32>
    %3 = tpu.matmul %1, %2, %cst {dimension_numbers = #tpu.dot_dimension_numbers<[1], [1], [0], [0], [0, 0, 1, 0], [], []>} : vector<128x256xf32>, vector<256x256xf32>, vector<128x256xf32> -> vector<128x256xf32>
    %c0_4 = arith.constant 0 : index
    %c0_5 = arith.constant 0 : index
    %4 = vector.load %arg5[%c0_4, %c0_5] : memref<256x256xf32, #tpu.memory_space<vmem>>, vector<256x256xf32>
    %cst_6 = arith.constant dense<0.000000e+00> : vector<128x256xf32>
    %5 = tpu.matmul %1, %4, %cst_6 {dimension_numbers = #tpu.dot_dimension_numbers<[1], [1], [0], [0], [0, 0, 1, 0], [], []>} : vector<128x256xf32>, vector<256x256xf32>, vector<128x256xf32> -> vector<128x256xf32>
    %6 = arith.negf %3 : vector<128x256xf32>
    %7 = math.exp %6 : vector<128x256xf32>
    %cst_7 = arith.constant 1.000000e+00 : f32
    %8 = vector.broadcast %cst_7 : f32 to vector<128x256xf32>
    %9 = arith.addf %8, %7 : vector<128x256xf32>
    %10 = arith.divf %8, %9 : vector<128x256xf32>
    %11 = arith.mulf %3, %10 : vector<128x256xf32>
    %12 = arith.mulf %11, %5 : vector<128x256xf32>
    %c0_8 = arith.constant 0 : index
    %c0_9 = arith.constant 0 : index
    %13 = vector.load %arg6[%c0_8, %c0_9] : memref<256x256xf32, #tpu.memory_space<vmem>>, vector<256x256xf32>
    %cst_10 = arith.constant dense<0.000000e+00> : vector<128x256xf32>
    %14 = tpu.matmul %12, %13, %cst_10 {dimension_numbers = #tpu.dot_dimension_numbers<[1], [1], [0], [0], [0, 0, 1, 0], [], []>} : vector<128x256xf32>, vector<256x256xf32>, vector<128x256xf32> -> vector<128x256xf32>
    %c0_i32 = arith.constant 0 : i32
    %15 = arith.cmpi eq, %arg2, %c0_i32 : i32
    %16 = arith.extui %15 : i1 to i32
    %c0_i32_11 = arith.constant 0 : i32
    %17 = arith.cmpi ne, %16, %c0_i32_11 : i32
    scf.if %17 {
      %c0_19 = arith.constant 0 : index
      %c0_20 = arith.constant 0 : index
      %33 = vector.load %arg9[%c0_19, %c0_20] : memref<128x256xf32, #tpu.memory_space<vmem>>, vector<128x256xf32>
      tpu.vector_store %arg9[%c0_19, %c0_20], %14 {strides = array<i32>} : memref<128x256xf32, #tpu.memory_space<vmem>>, vector<128x256xf32>,
    } else {
    }
    %c0_i32_12 = arith.constant 0 : i32
    %18 = arith.cmpi sgt, %arg2, %c0_i32_12 : i32
    %19 = arith.extui %18 : i1 to i32
    %c0_i32_13 = arith.constant 0 : i32
    %20 = arith.cmpi ne, %19, %c0_i32_13 : i32
    scf.if %20 {
      %c0_19 = arith.constant 0 : index
      %c0_20 = arith.constant 0 : index
      %33 = vector.load %arg9[%c0_19, %c0_20] : memref<128x256xf32, #tpu.memory_space<vmem>>, vector<128x256xf32>
      %34 = arith.addf %33, %14 : vector<128x256xf32>
      %c0_21 = arith.constant 0 : index
      %c0_22 = arith.constant 0 : index
      %35 = vector.load %arg9[%c0_21, %c0_22] : memref<128x256xf32, #tpu.memory_space<vmem>>, vector<128x256xf32>
      tpu.vector_store %arg9[%c0_21, %c0_22], %34 {strides = array<i32>} : memref<128x256xf32, #tpu.memory_space<vmem>>, vector<128x256xf32>,
    } else {
    }
    %c1_i32 = arith.constant 1 : i32
    %21 = arith.cmpi eq, %arg2, %c1_i32 : i32
    %22 = arith.extui %21 : i1 to i32
    %c0_i32_14 = arith.constant 0 : i32
    %23 = arith.cmpi ne, %22, %c0_i32_14 : i32
    scf.if %23 {
      %c0_19 = arith.constant 0 : index
      %c0_20 = arith.constant 0 : index
      %33 = vector.load %arg9[%c0_19, %c0_20] : memref<128x256xf32, #tpu.memory_space<vmem>>, vector<128x256xf32>
      %c0_21 = arith.constant 0 : index
      %c0_22 = arith.constant 0 : index
      %c0_23 = arith.constant 0 : index
      %34 = vector.load %arg7[%c0_21, %c0_22, %c0_23] : memref<1x128x256xf32, #tpu.memory_space<vmem>>, vector<1x128x256xf32>
      %35 = vector.shape_cast %34 : vector<1x128x256xf32> to vector<128x256xf32>
      %36 = vector.shape_cast %33 : vector<128x256xf32> to vector<1x128x256xf32>
      tpu.vector_store %arg7[%c0_21, %c0_22, %c0_23], %36 {strides = array<i32>} : memref<1x128x256xf32, #tpu.memory_space<vmem>>, vector<1x128x256xf32>,
    } else {
    }
    %24 = arith.mulf %12, %12 : vector<128x256xf32>
    %cst_15 = arith.constant dense<0.000000e+00> : vector<256xf32>
    %25 = vector.multi_reduction <add>, %24, %cst_15 [0] : vector<128x256xf32> to vector<256xf32>
    %26 = vector.shape_cast %25 : vector<256xf32> to vector<1x256xf32>
    %c256_i32 = arith.constant 256 : i32
    %27 = arith.muli %arg2, %c256_i32 : i32
    %28 = tpu.assume_multiple %27, 128 : i32
    %c0_16 = arith.constant 0 : index
    %c0_17 = arith.constant 0 : index
    %c0_18 = arith.constant 0 : index
    %29 = arith.index_cast %28 : i32 to index
    %30 = vector.load %arg8[%c0_16, %c0_17, %c0_18, %29] : memref<1x1x1x512xf32, #tpu.memory_space<vmem>>, vector<1x1x1x256xf32>
    %31 = vector.shape_cast %30 : vector<1x1x1x256xf32> to vector<1x256xf32>
    %32 = vector.shape_cast %26 : vector<1x256xf32> to vector<1x1x1x256xf32>
    tpu.vector_store %arg8[%c0_16, %c0_17, %c0_18, %29], %32 {strides = array<i32>} : memref<1x1x1x512xf32, #tpu.memory_space<vmem>>, vector<1x1x1x256xf32>,
    return
  }
  func.func @transform_0(%arg0: i32, %arg1: i32, %arg2: i32) -> (i32, i32, i32) {
    %c0_i32 = arith.constant 0 : i32
    %c0_i32_0 = arith.constant 0 : i32
    return %arg0, %arg1, %c0_i32 : i32, i32, i32
  }
  func.func @transform_1(%arg0: i32, %arg1: i32, %arg2: i32) -> (i32, i32) {
    %c0_i32 = arith.constant 0 : i32
    %c0_i32_0 = arith.constant 0 : i32
    return %arg2, %c0_i32 : i32, i32
  }
  func.func @transform_2(%arg0: i32, %arg1: i32, %arg2: i32) -> (i32, i32) {
    %c0_i32 = arith.constant 0 : i32
    %c0_i32_0 = arith.constant 0 : i32
    return %arg2, %c0_i32 : i32, i32
  }
  func.func @transform_3(%arg0: i32, %arg1: i32, %arg2: i32) -> (i32, i32) {
    %c0_i32 = arith.constant 0 : i32
    %c0_i32_0 = arith.constant 0 : i32
    return %c0_i32, %arg2 : i32, i32
  }
  func.func @transform_4(%arg0: i32, %arg1: i32, %arg2: i32) -> (i32, i32, i32) {
    %c0_i32 = arith.constant 0 : i32
    %c0_i32_0 = arith.constant 0 : i32
    return %arg0, %arg1, %c0_i32 : i32, i32, i32
  }
  func.func @transform_5(%arg0: i32, %arg1: i32, %arg2: i32) -> (i32, i32, i32, i32) {
    %c0_i32 = arith.constant 0 : i32
    %c0_i32_0 = arith.constant 0 : i32
    %c0_i32_1 = arith.constant 0 : i32
    return %arg0, %arg1, %c0_i32, %c0_i32_0 : i32, i32, i32, i32
  }
}

</mosaic_0001>

<llo_original>
// kernel: _qwen2_mlp_nd_impl.1
$region0: #{_qwen2_mlp_nd_impl.1}
  #allocation0 [shape = 'u32[]', space=smem, size = 0x4, offset = 0x4, fixed_abs, tag = 'smem constant byte address 0x4 - core index']
  #allocation1 [shape = 'u32[144,128]{1,0:T(1,128)}', space=vmem, size = 0x12000, scoped, tag = 'internal scratch']
  #allocation2 [shape = 'f32[128,256]{1,0:T(8,128)}', space=vmem, size = 0x20000, scoped, tag = 'scratch operand']
  %s0 = inlined_call_operand.hbm [shape: f32[2,256,256], index: 0, kind: input, shape index: {}]
  %s1 = inlined_call_operand.hbm [shape: f32[512,256], index: 1, kind: input, shape index: {}]
  %s2 = inlined_call_operand.hbm [shape: f32[512,256], index: 2, kind: input, shape index: {}]
  %s3 = inlined_call_operand.hbm [shape: f32[256,512], index: 3, kind: input, shape index: {}]
  %s4 = inlined_call_operand.hbm [shape: f32[2,256,256], index: 4, kind: output, shape index: {0}]
  %s5 = inlined_call_operand.vmem [shape: f32[2,2,1,512], index: 5, kind: output, shape index: {1}]
  %6 = xla_tuple %s4, %s5
  %s7 = sld [smem:[#allocation0]]
  $region85: #{_qwen2_mlp_nd_impl.1} parent=0
    _
  %s9 = ssub.s32 1, %s7
  %s10 = scalar_select 0, %s9, %s7
  $region1: #{_qwen2_mlp_nd_impl.1} parent=0
    #allocation3 [shape = 'u8[262144]{0}', space=vmem, size = 0x40000, scoped, tag = 'input window, operand 0']
    #allocation4 [shape = 's32[2]{0}', space=sflag, size = 0x8, scoped, tag = 'scoped memory for _qwen2_mlp_nd_impl.1']
    #allocation5 [shape = 's32[2]{0}', space=sflag, size = 0x8, scoped, tag = 'scoped memory for _qwen2_mlp_nd_impl.1']
    #allocation6 [shape = 'u8[524288]{0}', space=vmem, size = 0x80000, scoped, tag = 'input window, operand 1']
    #allocation7 [shape = 's32[2]{0}', space=sflag, size = 0x8, scoped, tag = 'scoped memory for _qwen2_mlp_nd_impl.1']
    #allocation8 [shape = 'u8[524288]{0}', space=vmem, size = 0x80000, scoped, tag = 'input window, operand 2']
    #allocation9 [shape = 'u8[524288]{0}', space=vmem, size = 0x80000, scoped, tag = 'input window, operand 3']
    #allocation10 [shape = 's32[2]{0}', space=sflag, size = 0x8, scoped, tag = 'scoped memory for _qwen2_mlp_nd_impl.1']
    #allocation11 [shape = 'u8[262144]{0}', space=vmem, size = 0x40000, scoped, tag = 'output window, operand 0']
    %11 = vsyncpa [#allocation4], 0
    %s12 = scalar_lea.sflag [#allocation4], 1
    %13 = vsyncpa %s12, 0
    %14 = vsyncpa [#allocation7], 0
    %s15 = scalar_lea.sflag [#allocation7], 1
    %16 = vsyncpa %s15, 0
    %17 = vsyncpa [#allocation10], 0
    %s18 = scalar_lea.sflag [#allocation10], 1
    %19 = vsyncpa %s18, 0
    %20 = vsyncpa [#allocation5], 0
    %s21 = scalar_lea.sflag [#allocation5], 1
    %22 = vsyncpa %s21, 0
    loop: start=0, step=1, limit=10
    $region2: #{_qwen2_mlp_nd_impl.1} parent=1 // loop_pre_header
      _
    $region3: #{_qwen2_mlp_nd_impl.1} parent=1 // loop_header
      %s24 = sphi 0, %s28
      %p25 = scmp.ge.s32.totalorder %s24, 10
      %s31 = sphi 0, %s50
      %s32 = sphi 0, %s46
      %s33 = sphi 0, %s42
      %s34 = sphi 0, %s31
      %s35 = sphi 0, %s32
      %s36 = sphi 0, %s33
      %s37 = sphi 0, %s34
      %s38 = sphi 0, %s35
      %s39 = sphi 0, %s36
      %s55 = sphi 0, %s57
      %s58 = sphi 0, %s55
      %s59 = sphi 0, %s58
      %s75 = sphi 0, %s59
      %s81 = sphi 0, %s83
      %s84 = sphi 0, %s81
      %s85 = sphi 0, %s84
      %s101 = sphi 0, %s85
      %s107 = sphi 0, %s109
      %s110 = sphi 0, %s107
      %s111 = sphi 0, %s110
      %s127 = sphi 0, %s111
      %s133 = sphi 0, %s135
      %s136 = sphi 0, %s133
      %s137 = sphi 0, %s136
      %s153 = sphi 0, %s137
      %s161 = sphi 0, %s163
      %s164 = sphi 0, %s161
      %s165 = sphi 0, %s164
      %s181 = sphi 0, %s165
      %s189 = sphi 0, %s191
      %s192 = sphi 0, %s189
      %s193 = sphi 0, %s192
      %s209 = sphi 0, %s193
    $region4: #{_qwen2_mlp_nd_impl.1} parent=1 // loop_header_branch
      %27 = sbr.rel (%p25) target = $region8
    $region5: #{_qwen2_mlp_nd_impl.1} parent=1 // loop_body
      %s29 = ssub.s32 %s24, 1
      %s30 = ssub.s32 %s24, 2
      %s40 = sadd.s32 1, %s33
      %p41 = scmp.ge.s32.totalorder %s40, 2
      %s42 = scalar_select %p41, 0, %s40
      %s43 = sadd.s32 1, %s32
      %s44 = scalar_select %p41, %s43, %s32
      %p45 = scmp.ge.s32.totalorder %s44, 2
      %s46 = scalar_select %p45, 0, %s44
      %s47 = sadd.s32 1, %s31
      %s48 = scalar_select %p45, %s47, %s31
      %p49 = scmp.ge.s32.totalorder %s48, 2
      %s50 = scalar_select %p49, 0, %s48
      %s51 = ssub.s32 %s31, %s50
      %s52 = ssub.s32 %s32, %s46
      %s53 = sor.u32 %s51, %s52
      %p54 = scmp.eq.s32.totalorder %s53, 0
      %s56 = sadd.s32 %s55, 1
      %s57 = scalar_select %p54, %s55, %s56
      %p60 = pneg %p54
      %p61 = scmp.eq.s32.totalorder %s24, 7
      %p62 = por %p60, %p61
      %p63 = scmp.ne.s32.totalorder %s55, %s58
      %p64 = scmp.eq.s32.totalorder %s24, 0
      %p65 = por %p63, %p64
      %p66 = scmp.ne.s32.totalorder %s55, %s58
      %p67 = scmp.eq.s32.totalorder %s29, 7
      %p68 = por %p66, %p67
      %p69 = scmp.ne.s32.totalorder %s58, %s59
      %p70 = scmp.eq.s32.totalorder %s29, 0
      %p71 = por %p69, %p70
      %p72 = scmp.ne.s32.totalorder %s58, %s59
      %p73 = scmp.eq.s32.totalorder %s30, 7
      %p74 = por %p72, %p73
      %p76 = scmp.ne.s32.totalorder %s59, %s75
      %p77 = scmp.eq.s32.totalorder %s30, 0
      %p78 = por %p76, %p77
      %s79 = ssub.s32 %s33, %s42
      %p80 = scmp.eq.s32.totalorder %s79, 0
      %s82 = sadd.s32 %s81, 1
      %s83 = scalar_select %p80, %s81, %s82
      %p86 = pneg %p80
      %p87 = scmp.eq.s32.totalorder %s24, 7
      %p88 = por %p86, %p87
      %p89 = scmp.ne.s32.totalorder %s81, %s84
      %p90 = scmp.eq.s32.totalorder %s24, 0
      %p91 = por %p89, %p90
      %p92 = scmp.ne.s32.totalorder %s81, %s84
      %p93 = scmp.eq.s32.totalorder %s29, 7
      %p94 = por %p92, %p93
      %p95 = scmp.ne.s32.totalorder %s84, %s85
      %p96 = scmp.eq.s32.totalorder %s29, 0
      %p97 = por %p95, %p96
      %p98 = scmp.ne.s32.totalorder %s84, %s85
      %p99 = scmp.eq.s32.totalorder %s30, 7
      %p100 = por %p98, %p99
      %p102 = scmp.ne.s32.totalorder %s85, %s101
      %p103 = scmp.eq.s32.totalorder %s30, 0
      %p104 = por %p102, %p103
      %s105 = ssub.s32 %s33, %s42
      %p106 = scmp.eq.s32.totalorder %s105, 0
      %s108 = sadd.s32 %s107, 1
      %s109 = scalar_select %p106, %s107, %s108
      %p112 = pneg %p106
      %p113 = scmp.eq.s32.totalorder %s24, 7
      %p114 = por %p112, %p113
      %p115 = scmp.ne.s32.totalorder %s107, %s110
      %p116 = scmp.eq.s32.totalorder %s24, 0
      %p117 = por %p115, %p116
      %p118 = scmp.ne.s32.totalorder %s107, %s110
      %p119 = scmp.eq.s32.totalorder %s29, 7
      %p120 = por %p118, %p119
      %p121 = scmp.ne.s32.totalorder %s110, %s111
      %p122 = scmp.eq.s32.totalorder %s29, 0
      %p123 = por %p121, %p122
      %p124 = scmp.ne.s32.totalorder %s110, %s111
      %p125 = scmp.eq.s32.totalorder %s30, 7
      %p126 = por %p124, %p125
      %p128 = scmp.ne.s32.totalorder %s111, %s127
      %p129 = scmp.eq.s32.totalorder %s30, 0
      %p130 = por %p128, %p129
      %s131 = ssub.s32 %s33, %s42
      %p132 = scmp.eq.s32.totalorder %s131, 0
      %s134 = sadd.s32 %s133, 1
      %s135 = scalar_select %p132, %s133, %s134
      %p138 = pneg %p132
      %p139 = scmp.eq.s32.totalorder %s24, 7
      %p140 = por %p138, %p139
      %p141 = scmp.ne.s32.totalorder %s133, %s136
      %p142 = scmp.eq.s32.totalorder %s24, 0
      %p143 = por %p141, %p142
      %p144 = scmp.ne.s32.totalorder %s133, %s136
      %p145 = scmp.eq.s32.totalorder %s29, 7
      %p146 = por %p144, %p145
      %p147 = scmp.ne.s32.totalorder %s136, %s137
      %p148 = scmp.eq.s32.totalorder %s29, 0
      %p149 = por %p147, %p148
      %p150 = scmp.ne.s32.totalorder %s136, %s137
      %p151 = scmp.eq.s32.totalorder %s30, 7
      %p152 = por %p150, %p151
      %p154 = scmp.ne.s32.totalorder %s137, %s153
      %p155 = scmp.eq.s32.totalorder %s30, 0
      %p156 = por %p154, %p155
      %s157 = ssub.s32 %s31, %s50
      %s158 = ssub.s32 %s32, %s46
      %s159 = sor.u32 %s157, %s158
      %p160 = scmp.eq.s32.totalorder %s159, 0
      %s162 = sadd.s32 %s161, 1
      %s163 = scalar_select %p160, %s161, %s162
      %p166 = pneg %p160
      %p167 = scmp.eq.s32.totalorder %s24, 7
      %p168 = por %p166, %p167
      %p169 = scmp.ne.s32.totalorder %s161, %s164
      %p170 = scmp.eq.s32.totalorder %s24, 0
      %p171 = por %p169, %p170
      %p172 = scmp.ne.s32.totalorder %s161, %s164
      %p173 = scmp.eq.s32.totalorder %s29, 7
      %p174 = por %p172, %p173
      %p175 = scmp.ne.s32.totalorder %s164, %s165
      %p176 = scmp.eq.s32.totalorder %s29, 0
      %p177 = por %p175, %p176
      %p178 = scmp.ne.s32.totalorder %s164, %s165
      %p179 = scmp.eq.s32.totalorder %s30, 7
      %p180 = por %p178, %p179
      %p182 = scmp.ne.s32.totalorder %s165, %s181
      %p183 = scmp.eq.s32.totalorder %s30, 0
      %p184 = por %p182, %p183
      %s185 = ssub.s32 %s31, %s50
      %s186 = ssub.s32 %s32, %s46
      %s187 = sor.u32 %s185, %s186
      %p188 = scmp.eq.s32.totalorder %s187, 0
      %s190 = sadd.s32 %s189, 1
      %s191 = scalar_select %p188, %s189, %s190
      %p194 = pneg %p188
      %p195 = scmp.eq.s32.totalorder %s24, 7
      %p196 = por %p194, %p195
      %p197 = scmp.ne.s32.totalorder %s189, %s192
      %p198 = scmp.eq.s32.totalorder %s24, 0
      %p199 = por %p197, %p198
      %p200 = scmp.ne.s32.totalorder %s189, %s192
      %p201 = scmp.eq.s32.totalorder %s29, 7
      %p202 = por %p200, %p201
      %p203 = scmp.ne.s32.totalorder %s192, %s193
      %p204 = scmp.eq.s32.totalorder %s29, 0
      %p205 = por %p203, %p204
      %p206 = scmp.ne.s32.totalorder %s192, %s193
      %p207 = scmp.eq.s32.totalorder %s30, 7
      %p208 = por %p206, %p207
      %p210 = scmp.ne.s32.totalorder %s193, %s209
      %p211 = scmp.eq.s32.totalorder %s30, 0
      %p212 = por %p210, %p211
      %p213 = scmp.le.s32.totalorder 1, %s24
      %p214 = scmp.lt.s32.totalorder %s24, 9
      %p215 = pnand %p213, %p214
      %p216 = pneg %p215
      // Predicated region
      $region9: #{_qwen2_mlp_nd_impl.1} parent=5 // pred_check
        _
      $region10: #{_qwen2_mlp_nd_impl.1} parent=5 // pred_check_branch
        %218 = sbr.rel (%p215) target = $region12
      $region11: #{_qwen2_mlp_nd_impl.1} parent=5 // pred_region
        %s219 = ssub.s32 %s24, 1
      $region12: #{_qwen2_mlp_nd_impl.1} parent=5 // pred_fallthru
        _
      %p220 = scmp.lt.s32.totalorder %s24, 8
      // Predicated region
      $region13: #{_qwen2_mlp_nd_impl.1} parent=5 // pred_check
        %p221 = pneg %p220
      $region14: #{_qwen2_mlp_nd_impl.1} parent=5 // pred_check_branch
        %223 = sbr.rel (%p221) target = $region16
      $region15: #{_qwen2_mlp_nd_impl.1} parent=5 // pred_region
        // Predicated region
        $region17: #{_qwen2_mlp_nd_impl.1} parent=15 // pred_check
          %p224 = pneg %p65
        $region18: #{_qwen2_mlp_nd_impl.1} parent=15 // pred_check_branch
          %226 = sbr.rel (%p224) target = $region20
        $region19: #{_qwen2_mlp_nd_impl.1} parent=15 // pred_region
          %s227 = sand.u32 %s55, 1
          %s228 = scalar_lea.sflag [#allocation4], %s227
          %s229 = sand.u32 %s55, 1
          %s230 = smul.addr %s229, 256
          %s231 = scalar_lea.vmem [#allocation3], %s230
          %s232 = smul.u32 16, %s32
          %s234 = ssub.s32 4096, 4096
          %235 = vsyncadd %s228, %s234
          %s236 = smul.addr %s232, 2
          %s237 = smul.addr %s31, 64
          %s238 = sadd.s32 %s236, %s237
          %s239 = smul.addr %s238, 128
          %s240 = scalar_lea.hbm %s0, %s239
          %s241 = sshll.u32 %s231, 4
          %s242 = int_to_ptr.vmem [resolvable:$true] %s241
          %247 = dma.hbm_to_vmem [thread:$0]  %s240, 4096, %s242, %s228, 256, 256, 16
        $region20: #{_qwen2_mlp_nd_impl.1} parent=15 // pred_fallthru
          _
        // Predicated region
        $region21: #{_qwen2_mlp_nd_impl.1} parent=15 // pred_check
          %p248 = pneg %p91
        $region22: #{_qwen2_mlp_nd_impl.1} parent=15 // pred_check_branch
          %250 = sbr.rel (%p248) target = $region24
        $region23: #{_qwen2_mlp_nd_impl.1} parent=15 // pred_region
          %s251 = sand.u32 %s24, 1
          %s252 = scalar_lea.sflag [#allocation7], %s251
          %s253 = sand.u32 %s81, 1
          %s254 = smul.addr %s253, 512
          %s255 = scalar_lea.vmem [#allocation6], %s254
          %s256 = smul.u32 32, %s33
          %s258 = ssub.s32 8192, 8192
          %259 = vsyncadd %s252, %s258
          %s260 = smul.addr %s256, 2
          %s261 = smul.addr %s260, 128
          %s262 = scalar_lea.hbm %s1, %s261
          %s263 = sshll.u32 %s255, 4
          %s264 = int_to_ptr.vmem [resolvable:$true] %s263
          %269 = dma.hbm_to_vmem [thread:$0]  %s262, 8192, %s264, %s252, 256, 256, 16
        $region24: #{_qwen2_mlp_nd_impl.1} parent=15 // pred_fallthru
          _
        // Predicated region
        $region25: #{_qwen2_mlp_nd_impl.1} parent=15 // pred_check
          %p270 = pneg %p117
        $region26: #{_qwen2_mlp_nd_impl.1} parent=15 // pred_check_branch
          %272 = sbr.rel (%p270) target = $region28
        $region27: #{_qwen2_mlp_nd_impl.1} parent=15 // pred_region
          %s273 = sand.u32 %s24, 1
          %s274 = scalar_lea.sflag [#allocation7], %s273
          %s275 = sand.u32 %s107, 1
          %s276 = smul.addr %s275, 512
          %s277 = scalar_lea.vmem [#allocation8], %s276
          %s278 = smul.u32 32, %s33
          %s280 = ssub.s32 8192, 8192
          %281 = vsyncadd %s274, %s280
          %s282 = smul.addr %s278, 2
          %s283 = smul.addr %s282, 128
          %s284 = scalar_lea.hbm %s2, %s283
          %s285 = sshll.u32 %s277, 4
          %s286 = int_to_ptr.vmem [resolvable:$true] %s285
          %291 = dma.hbm_to_vmem [thread:$0]  %s284, 8192, %s286, %s274, 256, 256, 16
        $region28: #{_qwen2_mlp_nd_impl.1} parent=15 // pred_fallthru
          _
        // Predicated region
        $region29: #{_qwen2_mlp_nd_impl.1} parent=15 // pred_check
          %p292 = pneg %p143
        $region30: #{_qwen2_mlp_nd_impl.1} parent=15 // pred_check_branch
          %294 = sbr.rel (%p292) target = $region32
        $region31: #{_qwen2_mlp_nd_impl.1} parent=15 // pred_region
          %s295 = sand.u32 %s133, 1
          %s296 = scalar_lea.sflag [#allocation10], %s295
          %s297 = sand.u32 %s133, 1
          %s298 = smul.addr %s297, 512
          %s299 = scalar_lea.vmem [#allocation9], %s298
          %s300 = smul.u32 2, %s33
          %s302 = ssub.s32 8192, 8192
          %303 = vsyncadd %s296, %s302
          %s304 = smul.addr %s300, 128
          %s305 = scalar_lea.hbm %s3, %s304
          %s306 = sshll.u32 %s299, 4
          %s307 = int_to_ptr.vmem [resolvable:$true] %s306
          %312 = dma.hbm_to_vmem [thread:$0]  %s305, 8192, %s307, %s296, 512, 256, 16
        $region32: #{_qwen2_mlp_nd_impl.1} parent=15 // pred_fallthru
          _
      $region16: #{_qwen2_mlp_nd_impl.1} parent=5 // pred_fallthru
        _
      %p313 = scmp.le.s32.totalorder 1, %s24
      %p314 = scmp.lt.s32.totalorder %s24, 9
      %p315 = pnand %p313, %p314
      %p316 = pneg %p315
      // Predicated region
      $region33: #{_qwen2_mlp_nd_impl.1} parent=5 // pred_check
        _
      $region34: #{_qwen2_mlp_nd_impl.1} parent=5 // pred_check_branch
        %318 = sbr.rel (%p315) target = $region36
      $region35: #{_qwen2_mlp_nd_impl.1} parent=5 // pred_region
        %s319 = ssub.s32 %s24, 1
        %s320 = sand.u32 %s58, 1
        %s321 = scalar_lea.sflag [#allocation4], %s320
        %s322 = sand.u32 %s58, 1
        %s323 = smul.addr %s322, 256
        %s324 = scalar_lea.vmem [#allocation3], %s323
        // Predicated region
        $region37: #{_qwen2_mlp_nd_impl.1} parent=35 // pred_check
          %p325 = pneg %p71
        $region38: #{_qwen2_mlp_nd_impl.1} parent=35 // pred_check_branch
          %327 = sbr.rel (%p325) target = $region40
        $region39: #{_qwen2_mlp_nd_impl.1} parent=35 // pred_region
          %328 = dma.done %s321, 4096
        $region40: #{_qwen2_mlp_nd_impl.1} parent=35 // pred_fallthru
          _
        %s329 = sand.u32 %s29, 1
        %s330 = scalar_lea.sflag [#allocation7], %s329
        %s331 = sand.u32 %s84, 1
        %s332 = smul.addr %s331, 512
        %s333 = scalar_lea.vmem [#allocation6], %s332
        // Predicated region
        $region41: #{_qwen2_mlp_nd_impl.1} parent=35 // pred_check
          %p334 = pneg %p97
        $region42: #{_qwen2_mlp_nd_impl.1} parent=35 // pred_check_branch
          %336 = sbr.rel (%p334) target = $region44
        $region43: #{_qwen2_mlp_nd_impl.1} parent=35 // pred_region
          %337 = dma.done %s330, 8192
        $region44: #{_qwen2_mlp_nd_impl.1} parent=35 // pred_fallthru
          _
        %s338 = sand.u32 %s29, 1
        %s339 = scalar_lea.sflag [#allocation7], %s338
        %s340 = sand.u32 %s110, 1
        %s341 = smul.addr %s340, 512
        %s342 = scalar_lea.vmem [#allocation8], %s341
        // Predicated region
        $region45: #{_qwen2_mlp_nd_impl.1} parent=35 // pred_check
          %p343 = pneg %p123
        $region46: #{_qwen2_mlp_nd_impl.1} parent=35 // pred_check_branch
          %345 = sbr.rel (%p343) target = $region48
        $region47: #{_qwen2_mlp_nd_impl.1} parent=35 // pred_region
          %346 = dma.done %s339, 8192
        $region48: #{_qwen2_mlp_nd_impl.1} parent=35 // pred_fallthru
          _
        %s347 = sand.u32 %s136, 1
        %s348 = scalar_lea.sflag [#allocation10], %s347
        %s349 = sand.u32 %s136, 1
        %s350 = smul.addr %s349, 512
        %s351 = scalar_lea.vmem [#allocation9], %s350
        // Predicated region
        $region49: #{_qwen2_mlp_nd_impl.1} parent=35 // pred_check
          %p352 = pneg %p149
        $region50: #{_qwen2_mlp_nd_impl.1} parent=35 // pred_check_branch
          %354 = sbr.rel (%p352) target = $region52
        $region51: #{_qwen2_mlp_nd_impl.1} parent=35 // pred_region
          %355 = dma.done %s348, 8192
        $region52: #{_qwen2_mlp_nd_impl.1} parent=35 // pred_fallthru
          _
        %s356 = sand.u32 %s58, 1
        %s357 = scalar_lea.sflag [#allocation4], %s356
        %s358 = sand.u32 %s58, 1
        %s359 = smul.addr %s358, 256
        %s360 = scalar_lea.vmem [#allocation3], %s359
        %p361 = pneg %p71
        %p362 = pneg %p68
        %s363 = sand.u32 %s29, 1
        %s364 = scalar_lea.sflag [#allocation7], %s363
        %s365 = sand.u32 %s84, 1
        %s366 = smul.addr %s365, 512
        %s367 = scalar_lea.vmem [#allocation6], %s366
        %p368 = pneg %p97
        %p369 = pneg %p94
        %s370 = sand.u32 %s29, 1
        %s371 = scalar_lea.sflag [#allocation7], %s370
        %s372 = sand.u32 %s110, 1
        %s373 = smul.addr %s372, 512
        %s374 = scalar_lea.vmem [#allocation8], %s373
        %p375 = pneg %p123
        %p376 = pneg %p120
        %s377 = sand.u32 %s136, 1
        %s378 = scalar_lea.sflag [#allocation10], %s377
        %s379 = sand.u32 %s136, 1
        %s380 = smul.addr %s379, 512
        %s381 = scalar_lea.vmem [#allocation9], %s380
        %p382 = pneg %p149
        %p383 = pneg %p146
        %p384 = pneg %p177
        %p385 = pneg %p174
        %s386 = sand.u32 %s164, 1
        %s387 = scalar_lea.sflag [#allocation5], %s386
        %s388 = sand.u32 %s164, 1
        %s389 = smul.addr %s388, 256
        %s390 = scalar_lea.vmem [#allocation11], %s389
        %p391 = pneg %p205
        %p392 = pneg %p202
        %p393 = scmp.lt.s32.totalorder %s34, 1
        %s394 = scalar_select %p393, %s34, 1
        %p395 = scmp.lt.s32.totalorder %s35, 1
        %s396 = scalar_select %p395, %s35, 1
        %s397 = smul.addr %s396, 4
        %s398 = smul.addr %s394, 8
        %s399 = sadd.s32 %s397, %s398
        %s400 = scalar_lea.vmem %s5, %s399
        %s401 = smul.u32 16, %s35
        %s402 = smul.u32 32, %s36
        %s403 = smul.u32 32, %s36
        %s404 = smul.u32 2, %s36
        %s405 = smul.u32 16, %s35
        %p406 = scmp.lt.s32.totalorder %s34, 1
        %s407 = scalar_select %p406, %s34, 1
        %p408 = scmp.lt.s32.totalorder %s35, 1
        %s409 = scalar_select %p408, %s35, 1
        %s410 = smul.addr %s409, 4
        %s411 = smul.addr %s407, 8
        %s412 = sadd.s32 %s410, %s411
        %s413 = scalar_lea.vmem %s5, %s412
        %v414 = vld [vmem:[%s324] sm:$0xff]
        %v415 = vld [vmem:[%s324 + $0x8] sm:$0xff]
        %v416 = vld [vmem:[%s324 + $0x10] sm:$0xff]
        %v417 = vld [vmem:[%s324 + $0x18] sm:$0xff]
        %v418 = vld [vmem:[%s324 + $0x20] sm:$0xff]
        %v419 = vld [vmem:[%s324 + $0x28] sm:$0xff]
        %v420 = vld [vmem:[%s324 + $0x30] sm:$0xff]
        %v421 = vld [vmem:[%s324 + $0x38] sm:$0xff]
        %v422 = vld [vmem:[%s324 + $0x40] sm:$0xff]
        %v423 = vld [vmem:[%s324 + $0x48] sm:$0xff]
        %v424 = vld [vmem:[%s324 + $0x50] sm:$0xff]
        %v425 = vld [vmem:[%s324 + $0x58] sm:$0xff]
        %v426 = vld [vmem:[%s324 + $0x60] sm:$0xff]
        %v427 = vld [vmem:[%s324 + $0x68] sm:$0xff]
        %v428 = vld [vmem:[%s324 + $0x70] sm:$0xff]
        %v429 = vld [vmem:[%s324 + $0x78] sm:$0xff]
        %v430 = vld [vmem:[%s324 + $0x80] sm:$0xff]
        %v431 = vld [vmem:[%s324 + $0x88] sm:$0xff]
        %v432 = vld [vmem:[%s324 + $0x90] sm:$0xff]
        %v433 = vld [vmem:[%s324 + $0x98] sm:$0xff]
        %v434 = vld [vmem:[%s324 + $0xa0] sm:$0xff]
        %v435 = vld [vmem:[%s324 + $0xa8] sm:$0xff]
        %v436 = vld [vmem:[%s324 + $0xb0] sm:$0xff]
        %v437 = vld [vmem:[%s324 + $0xb8] sm:$0xff]
        %v438 = vld [vmem:[%s324 + $0xc0] sm:$0xff]
        %v439 = vld [vmem:[%s324 + $0xc8] sm:$0xff]
        %v440 = vld [vmem:[%s324 + $0xd0] sm:$0xff]
        %v441 = vld [vmem:[%s324 + $0xd8] sm:$0xff]
        %v442 = vld [vmem:[%s324 + $0xe0] sm:$0xff]
        %v443 = vld [vmem:[%s324 + $0xe8] sm:$0xff]
        %v444 = vld [vmem:[%s324 + $0xf0] sm:$0xff]
        %v445 = vld [vmem:[%s324 + $0xf8] sm:$0xff]
        %v446 = vld [vmem:[%s333] sm:$0xff]
        %v447 = vld [vmem:[%s333 + $0x8] sm:$0xff]
        %v448 = vld [vmem:[%s333 + $0x10] sm:$0xff]
        %v449 = vld [vmem:[%s333 + $0x18] sm:$0xff]
        %v450 = vld [vmem:[%s333 + $0x20] sm:$0xff]
        %v451 = vld [vmem:[%s333 + $0x28] sm:$0xff]
        %v452 = vld [vmem:[%s333 + $0x30] sm:$0xff]
        %v453 = vld [vmem:[%s333 + $0x38] sm:$0xff]
        %v454 = vld [vmem:[%s333 + $0x40] sm:$0xff]
        %v455 = vld [vmem:[%s333 + $0x48] sm:$0xff]
        %v456 = vld [vmem:[%s333 + $0x50] sm:$0xff]
        %v457 = vld [vmem:[%s333 + $0x58] sm:$0xff]
        %v458 = vld [vmem:[%s333 + $0x60] sm:$0xff]
        %v459 = vld [vmem:[%s333 + $0x68] sm:$0xff]
        %v460 = vld [vmem:[%s333 + $0x70] sm:$0xff]
        %v461 = vld [vmem:[%s333 + $0x78] sm:$0xff]
        %v462 = vld [vmem:[%s333 + $0x80] sm:$0xff]
        %v463 = vld [vmem:[%s333 + $0x88] sm:$0xff]
        %v464 = vld [vmem:[%s333 + $0x90] sm:$0xff]
        %v465 = vld [vmem:[%s333 + $0x98] sm:$0xff]
        %v466 = vld [vmem:[%s333 + $0xa0] sm:$0xff]
        %v467 = vld [vmem:[%s333 + $0xa8] sm:$0xff]
        %v468 = vld [vmem:[%s333 + $0xb0] sm:$0xff]
        %v469 = vld [vmem:[%s333 + $0xb8] sm:$0xff]
        %v470 = vld [vmem:[%s333 + $0xc0] sm:$0xff]
        %v471 = vld [vmem:[%s333 + $0xc8] sm:$0xff]
        %v472 = vld [vmem:[%s333 + $0xd0] sm:$0xff]
        %v473 = vld [vmem:[%s333 + $0xd8] sm:$0xff]
        %v474 = vld [vmem:[%s333 + $0xe0] sm:$0xff]
        %v475 = vld [vmem:[%s333 + $0xe8] sm:$0xff]
        %v476 = vld [vmem:[%s333 + $0xf0] sm:$0xff]
        %v477 = vld [vmem:[%s333 + $0xf8] sm:$0xff]
        %v478 = vld [vmem:[%s333 + $0x100] sm:$0xff]
        %v479 = vld [vmem:[%s333 + $0x108] sm:$0xff]
        %v480 = vld [vmem:[%s333 + $0x110] sm:$0xff]
        %v481 = vld [vmem:[%s333 + $0x118] sm:$0xff]
        %v482 = vld [vmem:[%s333 + $0x120] sm:$0xff]
        %v483 = vld [vmem:[%s333 + $0x128] sm:$0xff]
        %v484 = vld [vmem:[%s333 + $0x130] sm:$0xff]
        %v485 = vld [vmem:[%s333 + $0x138] sm:$0xff]
        %v486 = vld [vmem:[%s333 + $0x140] sm:$0xff]
        %v487 = vld [vmem:[%s333 + $0x148] sm:$0xff]
        %v488 = vld [vmem:[%s333 + $0x150] sm:$0xff]
        %v489 = vld [vmem:[%s333 + $0x158] sm:$0xff]
        %v490 = vld [vmem:[%s333 + $0x160] sm:$0xff]
        %v491 = vld [vmem:[%s333 + $0x168] sm:$0xff]
        %v492 = vld [vmem:[%s333 + $0x170] sm:$0xff]
        %v493 = vld [vmem:[%s333 + $0x178] sm:$0xff]
        %v494 = vld [vmem:[%s333 + $0x180] sm:$0xff]
        %v495 = vld [vmem:[%s333 + $0x188] sm:$0xff]
        %v496 = vld [vmem:[%s333 + $0x190] sm:$0xff]
        %v497 = vld [vmem:[%s333 + $0x198] sm:$0xff]
        %v498 = vld [vmem:[%s333 + $0x1a0] sm:$0xff]
        %v499 = vld [vmem:[%s333 + $0x1a8] sm:$0xff]
        %v500 = vld [vmem:[%s333 + $0x1b0] sm:$0xff]
        %v501 = vld [vmem:[%s333 + $0x1b8] sm:$0xff]
        %v502 = vld [vmem:[%s333 + $0x1c0] sm:$0xff]
        %v503 = vld [vmem:[%s333 + $0x1c8] sm:$0xff]
        %v504 = vld [vmem:[%s333 + $0x1d0] sm:$0xff]
        %v505 = vld [vmem:[%s333 + $0x1d8] sm:$0xff]
        %v506 = vld [vmem:[%s333 + $0x1e0] sm:$0xff]
        %v507 = vld [vmem:[%s333 + $0x1e8] sm:$0xff]
        %v508 = vld [vmem:[%s333 + $0x1f0] sm:$0xff]
        %v509 = vld [vmem:[%s333 + $0x1f8] sm:$0xff]
        %510 = vmatprep.subr.mxu0 %v447
        %511 = vmatpush1.xpose.msra.mxu0 %v446
        %512 = vmatprep.subr.mxu0 %v449
        %513 = vmatpush1.xpose.msra.mxu0 %v448
        %514 = vmatprep.subr.mxu0 %v451
        %515 = vmatpush1.xpose.msra.mxu0 %v450
        %516 = vmatprep.subr.mxu0 %v453
        %517 = vmatpush1.xpose.msra.mxu0 %v452
        %518 = vmatprep.subr.mxu0 %v455
        %519 = vmatpush1.xpose.msra.mxu0 %v454
        %520 = vmatprep.subr.mxu0 %v457
        %521 = vmatpush1.xpose.msra.mxu0 %v456
        %522 = vmatprep.subr.mxu0 %v459
        %523 = vmatpush1.xpose.msra.mxu0 %v458
        %524 = vmatprep.subr.mxu0 %v461
        %525 = vmatpush1.xpose.msra.mxu0 %v460
        %526 = vmatprep.subr.mxu0 %v463
        %527 = vmatpush1.xpose.msra.mxu0 %v462
        %528 = vmatprep.subr.mxu0 %v465
        %529 = vmatpush1.xpose.msra.mxu0 %v464
        %530 = vmatprep.subr.mxu0 %v467
        %531 = vmatpush1.xpose.msra.mxu0 %v466
        %532 = vmatprep.subr.mxu0 %v469
        %533 = vmatpush1.xpose.msra.mxu0 %v468
        %534 = vmatprep.subr.mxu0 %v471
        %535 = vmatpush1.xpose.msra.mxu0 %v470
        %536 = vmatprep.subr.mxu0 %v473
        %537 = vmatpush1.xpose.msra.mxu0 %v472
        %538 = vmatprep.subr.mxu0 %v475
        %539 = vmatpush1.xpose.msra.mxu0 %v474
        %540 = vmatprep.subr.mxu0 %v477
        %541 = vmatpush1.xpose.msra.mxu0 %v476
        %542 = vmatprep.subr.mxu0 %v479
        %543 = vmatpush1.xpose.msra.mxu0 %v478
        %544 = vmatprep.subr.mxu0 %v481
        %545 = vmatpush1.xpose.msra.mxu0 %v480
        %546 = vmatprep.subr.mxu0 %v483
        %547 = vmatpush1.xpose.msra.mxu0 %v482
        %548 = vmatprep.subr.mxu0 %v485
        %549 = vmatpush1.xpose.msra.mxu0 %v484
        %550 = vmatprep.subr.mxu0 %v487
        %551 = vmatpush1.xpose.msra.mxu0 %v486
        %552 = vmatprep.subr.mxu0 %v489
        %553 = vmatpush1.xpose.msra.mxu0 %v488
        %554 = vmatprep.subr.mxu0 %v491
        %555 = vmatpush1.xpose.msra.mxu0 %v490
        %556 = vmatprep.subr.mxu0 %v493
        %557 = vmatpush1.xpose.msra.mxu0 %v492
        %558 = vmatprep.subr.mxu0 %v495
        %559 = vmatpush1.xpose.msra.mxu0 %v494
        %560 = vmatprep.subr.mxu0 %v497
        %561 = vmatpush1.xpose.msra.mxu0 %v496
        %562 = vmatprep.subr.mxu0 %v499
        %563 = vmatpush1.xpose.msra.mxu0 %v498
        %564 = vmatprep.subr.mxu0 %v501
        %565 = vmatpush1.xpose.msra.mxu0 %v500
        %566 = vmatprep.subr.mxu0 %v503
        %567 = vmatpush1.xpose.msra.mxu0 %v502
        %568 = vmatprep.subr.mxu0 %v505
        %569 = vmatpush1.xpose.msra.mxu0 %v504
        %570 = vmatprep.subr.mxu0 %v507
        %571 = vmatpush1.xpose.msra.mxu0 %v506
        %572 = vmatprep.subr.mxu0 %v509
        %573 = vmatpush1.xpose.msra.mxu0 %v508
        %574 = vmatprep.mubr.f32.mxu0 %v415
        %575 = vmatmul.mubr.f32.gmra.mrb[0].mxu0 %v414
        %v576 = vpop.f32.mrb[0].mxu0
        %v577 = vadd.f32 0.0, %v576
        %v578 = vpop.f32.mrb[0].mxu0
        %v579 = vadd.f32 0.0, %v578
        %580 = vmatprep.mubr.f32.mxu0 %v417
        %581 = vmatmul.mubr.f32.gmra.mrb[0].mxu0 %v416
        %v582 = vpop.f32.mrb[0].mxu0
        %v583 = vadd.f32 0.0, %v582
        %v584 = vpop.f32.mrb[0].mxu0
        %v585 = vadd.f32 0.0, %v584
        %586 = vmatprep.mubr.f32.mxu0 %v419
        %587 = vmatmul.mubr.f32.gmra.mrb[0].mxu0 %v418
        %v588 = vpop.f32.mrb[0].mxu0
        %v589 = vadd.f32 0.0, %v588
        %v590 = vpop.f32.mrb[0].mxu0
        %v591 = vadd.f32 0.0, %v590
        %592 = vmatprep.mubr.f32.mxu0 %v421
        %593 = vmatmul.mubr.f32.gmra.mrb[0].mxu0 %v420
        %v594 = vpop.f32.mrb[0].mxu0
        %v595 = vadd.f32 0.0, %v594
        %v596 = vpop.f32.mrb[0].mxu0
        %v597 = vadd.f32 0.0, %v596
        %598 = vmatprep.mubr.f32.mxu0 %v423
        %599 = vmatmul.mubr.f32.gmra.mrb[0].mxu0 %v422
        %v600 = vpop.f32.mrb[0].mxu0
        %v601 = vadd.f32 0.0, %v600
        %v602 = vpop.f32.mrb[0].mxu0
        %v603 = vadd.f32 0.0, %v602
        %604 = vmatprep.mubr.f32.mxu0 %v425
        %605 = vmatmul.mubr.f32.gmra.mrb[0].mxu0 %v424
        %v606 = vpop.f32.mrb[0].mxu0
        %v607 = vadd.f32 0.0, %v606
        %v608 = vpop.f32.mrb[0].mxu0
        %v609 = vadd.f32 0.0, %v608
        %610 = vmatprep.mubr.f32.mxu0 %v427
        %611 = vmatmul.mubr.f32.gmra.mrb[0].mxu0 %v426
        %v612 = vpop.f32.mrb[0].mxu0
        %v613 = vadd.f32 0.0, %v612
        %v614 = vpop.f32.mrb[0].mxu0
        %v615 = vadd.f32 0.0, %v614
        %616 = vmatprep.mubr.f32.mxu0 %v429
        %617 = vmatmul.mubr.f32.gmra.mrb[0].mxu0 %v428
        %v618 = vpop.f32.mrb[0].mxu0
        %v619 = vadd.f32 0.0, %v618
        %v620 = vpop.f32.mrb[0].mxu0
        %v621 = vadd.f32 0.0, %v620
        %622 = vmatprep.mubr.f32.mxu0 %v431
        %623 = vmatmul.mubr.f32.gmra.mrb[0].mxu0 %v430
        %v624 = vpop.f32.mrb[0].mxu0
        %v625 = vadd.f32 0.0, %v624
        %v626 = vpop.f32.mrb[0].mxu0
        %v627 = vadd.f32 0.0, %v626
        %628 = vmatprep.mubr.f32.mxu0 %v433
        %629 = vmatmul.mubr.f32.gmra.mrb[0].mxu0 %v432
        %v630 = vpop.f32.mrb[0].mxu0
        %v631 = vadd.f32 0.0, %v630
        %v632 = vpop.f32.mrb[0].mxu0
        %v633 = vadd.f32 0.0, %v632
        %634 = vmatprep.mubr.f32.mxu0 %v435
        %635 = vmatmul.mubr.f32.gmra.mrb[0].mxu0 %v434
        %v636 = vpop.f32.mrb[0].mxu0
        %v637 = vadd.f32 0.0, %v636
        %v638 = vpop.f32.mrb[0].mxu0
        %v639 = vadd.f32 0.0, %v638
        %640 = vmatprep.mubr.f32.mxu0 %v437
        %641 = vmatmul.mubr.f32.gmra.mrb[0].mxu0 %v436
        %v642 = vpop.f32.mrb[0].mxu0
        %v643 = vadd.f32 0.0, %v642
        %v644 = vpop.f32.mrb[0].mxu0
        %v645 = vadd.f32 0.0, %v644
        %646 = vmatprep.mubr.f32.mxu0 %v439
        %647 = vmatmul.mubr.f32.gmra.mrb[0].mxu0 %v438
        %v648 = vpop.f32.mrb[0].mxu0
        %v649 = vadd.f32 0.0, %v648
        %v650 = vpop.f32.mrb[0].mxu0
        %v651 = vadd.f32 0.0, %v650
        %652 = vmatprep.mubr.f32.mxu0 %v441
        %653 = vmatmul.mubr.f32.gmra.mrb[0].mxu0 %v440
        %v654 = vpop.f32.mrb[0].mxu0
        %v655 = vadd.f32 0.0, %v654
        %v656 = vpop.f32.mrb[0].mxu0
        %v657 = vadd.f32 0.0, %v656
        %658 = vmatprep.mubr.f32.mxu0 %v443
        %659 = vmatmul.mubr.f32.gmra.mrb[0].mxu0 %v442
        %v660 = vpop.f32.mrb[0].mxu0
        %v661 = vadd.f32 0.0, %v660
        %v662 = vpop.f32.mrb[0].mxu0
        %v663 = vadd.f32 0.0, %v662
        %664 = vmatprep.mubr.f32.mxu0 %v445
        %665 = vmatmul.mubr.f32.gmra.mrb[0].mxu0 %v444
        %v666 = vpop.f32.mrb[0].mxu0
        %v667 = vadd.f32 0.0, %v666
        %v668 = vpop.f32.mrb[0].mxu0
        %v669 = vadd.f32 0.0, %v668
        %670 = vdwg.mxu0
        %v671 = vld [vmem:[%s342] sm:$0xff]
        %v672 = vld [vmem:[%s342 + $0x8] sm:$0xff]
        %v673 = vld [vmem:[%s342 + $0x10] sm:$0xff]
        %v674 = vld [vmem:[%s342 + $0x18] sm:$0xff]
        %v675 = vld [vmem:[%s342 + $0x20] sm:$0xff]
        %v676 = vld [vmem:[%s342 + $0x28] sm:$0xff]
        %v677 = vld [vmem:[%s342 + $0x30] sm:$0xff]
        %v678 = vld [vmem:[%s342 + $0x38] sm:$0xff]
        %v679 = vld [vmem:[%s342 + $0x40] sm:$0xff]
        %v680 = vld [vmem:[%s342 + $0x48] sm:$0xff]
        %v681 = vld [vmem:[%s342 + $0x50] sm:$0xff]
        %v682 = vld [vmem:[%s342 + $0x58] sm:$0xff]
        %v683 = vld [vmem:[%s342 + $0x60] sm:$0xff]
        %v684 = vld [vmem:[%s342 + $0x68] sm:$0xff]
        %v685 = vld [vmem:[%s342 + $0x70] sm:$0xff]
        %v686 = vld [vmem:[%s342 + $0x78] sm:$0xff]
        %v687 = vld [vmem:[%s342 + $0x80] sm:$0xff]
        %v688 = vld [vmem:[%s342 + $0x88] sm:$0xff]
        %v689 = vld [vmem:[%s342 + $0x90] sm:$0xff]
        %v690 = vld [vmem:[%s342 + $0x98] sm:$0xff]
        %v691 = vld [vmem:[%s342 + $0xa0] sm:$0xff]
        %v692 = vld [vmem:[%s342 + $0xa8] sm:$0xff]
        %v693 = vld [vmem:[%s342 + $0xb0] sm:$0xff]
        %v694 = vld [vmem:[%s342 + $0xb8] sm:$0xff]
        %v695 = vld [vmem:[%s342 + $0xc0] sm:$0xff]
        %v696 = vld [vmem:[%s342 + $0xc8] sm:$0xff]
        %v697 = vld [vmem:[%s342 + $0xd0] sm:$0xff]
        %v698 = vld [vmem:[%s342 + $0xd8] sm:$0xff]
        %v699 = vld [vmem:[%s342 + $0xe0] sm:$0xff]
        %v700 = vld [vmem:[%s342 + $0xe8] sm:$0xff]
        %v701 = vld [vmem:[%s342 + $0xf0] sm:$0xff]
        %v702 = vld [vmem:[%s342 + $0xf8] sm:$0xff]
        %v703 = vld [vmem:[%s342 + $0x100] sm:$0xff]
        %v704 = vld [vmem:[%s342 + $0x108] sm:$0xff]
        %v705 = vld [vmem:[%s342 + $0x110] sm:$0xff]
        %v706 = vld [vmem:[%s342 + $0x118] sm:$0xff]
        %v707 = vld [vmem:[%s342 + $0x120] sm:$0xff]
        %v708 = vld [vmem:[%s342 + $0x128] sm:$0xff]
        %v709 = vld [vmem:[%s342 + $0x130] sm:$0xff]
        %v710 = vld [vmem:[%s342 + $0x138] sm:$0xff]
        %v711 = vld [vmem:[%s342 + $0x140] sm:$0xff]
        %v712 = vld [vmem:[%s342 + $0x148] sm:$0xff]
        %v713 = vld [vmem:[%s342 + $0x150] sm:$0xff]
        %v714 = vld [vmem:[%s342 + $0x158] sm:$0xff]
        %v715 = vld [vmem:[%s342 + $0x160] sm:$0xff]
        %v716 = vld [vmem:[%s342 + $0x168] sm:$0xff]
        %v717 = vld [vmem:[%s342 + $0x170] sm:$0xff]
        %v718 = vld [vmem:[%s342 + $0x178] sm:$0xff]
        %v719 = vld [vmem:[%s342 + $0x180] sm:$0xff]
        %v720 = vld [vmem:[%s342 + $0x188] sm:$0xff]
        %v721 = vld [vmem:[%s342 + $0x190] sm:$0xff]
        %v722 = vld [vmem:[%s342 + $0x198] sm:$0xff]
        %v723 = vld [vmem:[%s342 + $0x1a0] sm:$0xff]
        %v724 = vld [vmem:[%s342 + $0x1a8] sm:$0xff]
        %v725 = vld [vmem:[%s342 + $0x1b0] sm:$0xff]
        %v726 = vld [vmem:[%s342 + $0x1b8] sm:$0xff]
        %v727 = vld [vmem:[%s342 + $0x1c0] sm:$0xff]
        %v728 = vld [vmem:[%s342 + $0x1c8] sm:$0xff]
        %v729 = vld [vmem:[%s342 + $0x1d0] sm:$0xff]
        %v730 = vld [vmem:[%s342 + $0x1d8] sm:$0xff]
        %v731 = vld [vmem:[%s342 + $0x1e0] sm:$0xff]
        %v732 = vld [vmem:[%s342 + $0x1e8] sm:$0xff]
        %v733 = vld [vmem:[%s342 + $0x1f0] sm:$0xff]
        %v734 = vld [vmem:[%s342 + $0x1f8] sm:$0xff]
        %735 = vmatprep.subr.mxu0 %v672
        %736 = vmatpush1.xpose.msra.mxu0 %v671
        %737 = vmatprep.subr.mxu0 %v674
        %738 = vmatpush1.xpose.msra.mxu0 %v673
        %739 = vmatprep.subr.mxu0 %v676
        %740 = vmatpush1.xpose.msra.mxu0 %v675
        %741 = vmatprep.subr.mxu0 %v678
        %742 = vmatpush1.xpose.msra.mxu0 %v677
        %743 = vmatprep.subr.mxu0 %v680
        %744 = vmatpush1.xpose.msra.mxu0 %v679
        %745 = vmatprep.subr.mxu0 %v682
        %746 = vmatpush1.xpose.msra.mxu0 %v681
        %747 = vmatprep.subr.mxu0 %v684
        %748 = vmatpush1.xpose.msra.mxu0 %v683
        %749 = vmatprep.subr.mxu0 %v686
        %750 = vmatpush1.xpose.msra.mxu0 %v685
        %751 = vmatprep.subr.mxu0 %v688
        %752 = vmatpush1.xpose.msra.mxu0 %v687
        %753 = vmatprep.subr.mxu0 %v690
        %754 = vmatpush1.xpose.msra.mxu0 %v689
        %755 = vmatprep.subr.mxu0 %v692
        %756 = vmatpush1.xpose.msra.mxu0 %v691
        %757 = vmatprep.subr.mxu0 %v694
        %758 = vmatpush1.xpose.msra.mxu0 %v693
        %759 = vmatprep.subr.mxu0 %v696
        %760 = vmatpush1.xpose.msra.mxu0 %v695
        %761 = vmatprep.subr.mxu0 %v698
        %762 = vmatpush1.xpose.msra.mxu0 %v697
        %763 = vmatprep.subr.mxu0 %v700
        %764 = vmatpush1.xpose.msra.mxu0 %v699
        %765 = vmatprep.subr.mxu0 %v702
        %766 = vmatpush1.xpose.msra.mxu0 %v701
        %767 = vmatprep.subr.mxu0 %v704
        %768 = vmatpush1.xpose.msra.mxu0 %v703
        %769 = vmatprep.subr.mxu0 %v706
        %770 = vmatpush1.xpose.msra.mxu0 %v705
        %771 = vmatprep.subr.mxu0 %v708
        %772 = vmatpush1.xpose.msra.mxu0 %v707
        %773 = vmatprep.subr.mxu0 %v710
        %774 = vmatpush1.xpose.msra.mxu0 %v709
        %775 = vmatprep.subr.mxu0 %v712
        %776 = vmatpush1.xpose.msra.mxu0 %v711
        %777 = vmatprep.subr.mxu0 %v714
        %778 = vmatpush1.xpose.msra.mxu0 %v713
        %779 = vmatprep.subr.mxu0 %v716
        %780 = vmatpush1.xpose.msra.mxu0 %v715
        %781 = vmatprep.subr.mxu0 %v718
        %782 = vmatpush1.xpose.msra.mxu0 %v717
        %783 = vmatprep.subr.mxu0 %v720
        %784 = vmatpush1.xpose.msra.mxu0 %v719
        %785 = vmatprep.subr.mxu0 %v722
        %786 = vmatpush1.xpose.msra.mxu0 %v721
        %787 = vmatprep.subr.mxu0 %v724
        %788 = vmatpush1.xpose.msra.mxu0 %v723
        %789 = vmatprep.subr.mxu0 %v726
        %790 = vmatpush1.xpose.msra.mxu0 %v725
        %791 = vmatprep.subr.mxu0 %v728
        %792 = vmatpush1.xpose.msra.mxu0 %v727
        %793 = vmatprep.subr.mxu0 %v730
        %794 = vmatpush1.xpose.msra.mxu0 %v729
        %795 = vmatprep.subr.mxu0 %v732
        %796 = vmatpush1.xpose.msra.mxu0 %v731
        %797 = vmatprep.subr.mxu0 %v734
        %798 = vmatpush1.xpose.msra.mxu0 %v733
        %799 = vmatprep.mubr.f32.mxu0 %v415
        %800 = vmatmul.mubr.f32.gmra.mrb[0].mxu0 %v414
        %v801 = vpop.f32.mrb[0].mxu0
        %v802 = vadd.f32 0.0, %v801
        %v803 = vpop.f32.mrb[0].mxu0
        %v804 = vadd.f32 0.0, %v803
        %805 = vmatprep.mubr.f32.mxu0 %v417
        %806 = vmatmul.mubr.f32.gmra.mrb[0].mxu0 %v416
        %v807 = vpop.f32.mrb[0].mxu0
        %v808 = vadd.f32 0.0, %v807
        %v809 = vpop.f32.mrb[0].mxu0
        %v810 = vadd.f32 0.0, %v809
        %811 = vmatprep.mubr.f32.mxu0 %v419
        %812 = vmatmul.mubr.f32.gmra.mrb[0].mxu0 %v418
        %v813 = vpop.f32.mrb[0].mxu0
        %v814 = vadd.f32 0.0, %v813
        %v815 = vpop.f32.mrb[0].mxu0
        %v816 = vadd.f32 0.0, %v815
        %817 = vmatprep.mubr.f32.mxu0 %v421
        %818 = vmatmul.mubr.f32.gmra.mrb[0].mxu0 %v420
        %v819 = vpop.f32.mrb[0].mxu0
        %v820 = vadd.f32 0.0, %v819
        %v821 = vpop.f32.mrb[0].mxu0
        %v822 = vadd.f32 0.0, %v821
        %823 = vmatprep.mubr.f32.mxu0 %v423
        %824 = vmatmul.mubr.f32.gmra.mrb[0].mxu0 %v422
        %v825 = vpop.f32.mrb[0].mxu0
        %v826 = vadd.f32 0.0, %v825
        %v827 = vpop.f32.mrb[0].mxu0
        %v828 = vadd.f32 0.0, %v827
        %829 = vmatprep.mubr.f32.mxu0 %v425
        %830 = vmatmul.mubr.f32.gmra.mrb[0].mxu0 %v424
        %v831 = vpop.f32.mrb[0].mxu0
        %v832 = vadd.f32 0.0, %v831
        %v833 = vpop.f32.mrb[0].mxu0
        %v834 = vadd.f32 0.0, %v833
        %835 = vmatprep.mubr.f32.mxu0 %v427
        %836 = vmatmul.mubr.f32.gmra.mrb[0].mxu0 %v426
        %v837 = vpop.f32.mrb[0].mxu0
        %v838 = vadd.f32 0.0, %v837
        %v839 = vpop.f32.mrb[0].mxu0
        %v840 = vadd.f32 0.0, %v839
        %841 = vmatprep.mubr.f32.mxu0 %v429
        %842 = vmatmul.mubr.f32.gmra.mrb[0].mxu0 %v428
        %v843 = vpop.f32.mrb[0].mxu0
        %v844 = vadd.f32 0.0, %v843
        %v845 = vpop.f32.mrb[0].mxu0
        %v846 = vadd.f32 0.0, %v845
        %847 = vmatprep.mubr.f32.mxu0 %v431
        %848 = vmatmul.mubr.f32.gmra.mrb[0].mxu0 %v430
        %v849 = vpop.f32.mrb[0].mxu0
        %v850 = vadd.f32 0.0, %v849
        %v851 = vpop.f32.mrb[0].mxu0
        %v852 = vadd.f32 0.0, %v851
        %853 = vmatprep.mubr.f32.mxu0 %v433
        %854 = vmatmul.mubr.f32.gmra.mrb[0].mxu0 %v432
        %v855 = vpop.f32.mrb[0].mxu0
        %v856 = vadd.f32 0.0, %v855
        %v857 = vpop.f32.mrb[0].mxu0
        %v858 = vadd.f32 0.0, %v857
        %859 = vmatprep.mubr.f32.mxu0 %v435
        %860 = vmatmul.mubr.f32.gmra.mrb[0].mxu0 %v434
        %v861 = vpop.f32.mrb[0].mxu0
        %v862 = vadd.f32 0.0, %v861
        %v863 = vpop.f32.mrb[0].mxu0
        %v864 = vadd.f32 0.0, %v863
        %865 = vmatprep.mubr.f32.mxu0 %v437
        %866 = vmatmul.mubr.f32.gmra.mrb[0].mxu0 %v436
        %v867 = vpop.f32.mrb[0].mxu0
        %v868 = vadd.f32 0.0, %v867
        %v869 = vpop.f32.mrb[0].mxu0
        %v870 = vadd.f32 0.0, %v869
        %871 = vmatprep.mubr.f32.mxu0 %v439
        %872 = vmatmul.mubr.f32.gmra.mrb[0].mxu0 %v438
        %v873 = vpop.f32.mrb[0].mxu0
        %v874 = vadd.f32 0.0, %v873
        %v875 = vpop.f32.mrb[0].mxu0
        %v876 = vadd.f32 0.0, %v875
        %877 = vmatprep.mubr.f32.mxu0 %v441
        %878 = vmatmul.mubr.f32.gmra.mrb[0].mxu0 %v440
        %v879 = vpop.f32.mrb[0].mxu0
        %v880 = vadd.f32 0.0, %v879
        %v881 = vpop.f32.mrb[0].mxu0
        %v882 = vadd.f32 0.0, %v881
        %883 = vmatprep.mubr.f32.mxu0 %v443
        %884 = vmatmul.mubr.f32.gmra.mrb[0].mxu0 %v442
        %v885 = vpop.f32.mrb[0].mxu0
        %v886 = vadd.f32 0.0, %v885
        %v887 = vpop.f32.mrb[0].mxu0
        %v888 = vadd.f32 0.0, %v887
        %889 = vmatprep.mubr.f32.mxu0 %v445
        %890 = vmatmul.mubr.f32.gmra.mrb[0].mxu0 %v444
        %v891 = vpop.f32.mrb[0].mxu0
        %v892 = vadd.f32 0.0, %v891
        %v893 = vpop.f32.mrb[0].mxu0
        %v894 = vadd.f32 0.0, %v893
        %895 = vdwg.mxu0
        %v896 = vxor.u32 %v577, 2147483648
        %v897 = vxor.u32 %v579, 2147483648
        %v898 = vxor.u32 %v583, 2147483648
        %v899 = vxor.u32 %v585, 2147483648
        %v900 = vxor.u32 %v589, 2147483648
        %v901 = vxor.u32 %v591, 2147483648
        %v902 = vxor.u32 %v595, 2147483648
        %v903 = vxor.u32 %v597, 2147483648
        %v904 = vxor.u32 %v601, 2147483648
        %v905 = vxor.u32 %v603, 2147483648
        %v906 = vxor.u32 %v607, 2147483648
        %v907 = vxor.u32 %v609, 2147483648
        %v908 = vxor.u32 %v613, 2147483648
        %v909 = vxor.u32 %v615, 2147483648
        %v910 = vxor.u32 %v619, 2147483648
        %v911 = vxor.u32 %v621, 2147483648
        %v912 = vxor.u32 %v625, 2147483648
        %v913 = vxor.u32 %v627, 2147483648
        %v914 = vxor.u32 %v631, 2147483648
        %v915 = vxor.u32 %v633, 2147483648
        %v916 = vxor.u32 %v637, 2147483648
        %v917 = vxor.u32 %v639, 2147483648
        %v918 = vxor.u32 %v643, 2147483648
        %v919 = vxor.u32 %v645, 2147483648
        %v920 = vxor.u32 %v649, 2147483648
        %v921 = vxor.u32 %v651, 2147483648
        %v922 = vxor.u32 %v655, 2147483648
        %v923 = vxor.u32 %v657, 2147483648
        %v924 = vxor.u32 %v661, 2147483648
        %v925 = vxor.u32 %v663, 2147483648
        %v926 = vxor.u32 %v667, 2147483648
        %v927 = vxor.u32 %v669, 2147483648
        %v928 = vmul.f32 %v896, 1.442695
        %v929 = vpow.pop %v928
        %v930 = vmul.f32 %v897, 1.442695
        %v931 = vpow.pop %v930
        %v932 = vmul.f32 %v898, 1.442695
        %v933 = vpow.pop %v932
        %v934 = vmul.f32 %v899, 1.442695
        %v935 = vpow.pop %v934
        %v936 = vmul.f32 %v900, 1.442695
        %v937 = vpow.pop %v936
        %v938 = vmul.f32 %v901, 1.442695
        %v939 = vpow.pop %v938
        %v940 = vmul.f32 %v902, 1.442695
        %v941 = vpow.pop %v940
        %v942 = vmul.f32 %v903, 1.442695
        %v943 = vpow.pop %v942
        %v944 = vmul.f32 %v904, 1.442695
        %v945 = vpow.pop %v944
        %v946 = vmul.f32 %v905, 1.442695
        %v947 = vpow.pop %v946
        %v948 = vmul.f32 %v906, 1.442695
        %v949 = vpow.pop %v948
        %v950 = vmul.f32 %v907, 1.442695
        %v951 = vpow.pop %v950
        %v952 = vmul.f32 %v908, 1.442695
        %v953 = vpow.pop %v952
        %v954 = vmul.f32 %v909, 1.442695
        %v955 = vpow.pop %v954
        %v956 = vmul.f32 %v910, 1.442695
        %v957 = vpow.pop %v956
        %v958 = vmul.f32 %v911, 1.442695
        %v959 = vpow.pop %v958
        %v960 = vmul.f32 %v912, 1.442695
        %v961 = vpow.pop %v960
        %v962 = vmul.f32 %v913, 1.442695
        %v963 = vpow.pop %v962
        %v964 = vmul.f32 %v914, 1.442695
        %v965 = vpow.pop %v964
        %v966 = vmul.f32 %v915, 1.442695
        %v967 = vpow.pop %v966
        %v968 = vmul.f32 %v916, 1.442695
        %v969 = vpow.pop %v968
        %v970 = vmul.f32 %v917, 1.442695
        %v971 = vpow.pop %v970
        %v972 = vmul.f32 %v918, 1.442695
        %v973 = vpow.pop %v972
        %v974 = vmul.f32 %v919, 1.442695
        %v975 = vpow.pop %v974
        %v976 = vmul.f32 %v920, 1.442695
        %v977 = vpow.pop %v976
        %v978 = vmul.f32 %v921, 1.442695
        %v979 = vpow.pop %v978
        %v980 = vmul.f32 %v922, 1.442695
        %v981 = vpow.pop %v980
        %v982 = vmul.f32 %v923, 1.442695
        %v983 = vpow.pop %v982
        %v984 = vmul.f32 %v924, 1.442695
        %v985 = vpow.pop %v984
        %v986 = vmul.f32 %v925, 1.442695
        %v987 = vpow.pop %v986
        %v988 = vmul.f32 %v926, 1.442695
        %v989 = vpow.pop %v988
        %v990 = vmul.f32 %v927, 1.442695
        %v991 = vpow.pop %v990
        %v992 = vadd.f32 %v929, 1.0
        %v993 = vadd.f32 %v931, 1.0
        %v994 = vadd.f32 %v933, 1.0
        %v995 = vadd.f32 %v935, 1.0
        %v996 = vadd.f32 %v937, 1.0
        %v997 = vadd.f32 %v939, 1.0
        %v998 = vadd.f32 %v941, 1.0
        %v999 = vadd.f32 %v943, 1.0
        %v1000 = vadd.f32 %v945, 1.0
        %v1001 = vadd.f32 %v947, 1.0
        %v1002 = vadd.f32 %v949, 1.0
        %v1003 = vadd.f32 %v951, 1.0
        %v1004 = vadd.f32 %v953, 1.0
        %v1005 = vadd.f32 %v955, 1.0
        %v1006 = vadd.f32 %v957, 1.0
        %v1007 = vadd.f32 %v959, 1.0
        %v1008 = vadd.f32 %v961, 1.0
        %v1009 = vadd.f32 %v963, 1.0
        %v1010 = vadd.f32 %v965, 1.0
        %v1011 = vadd.f32 %v967, 1.0
        %v1012 = vadd.f32 %v969, 1.0
        %v1013 = vadd.f32 %v971, 1.0
        %v1014 = vadd.f32 %v973, 1.0
        %v1015 = vadd.f32 %v975, 1.0
        %v1016 = vadd.f32 %v977, 1.0
        %v1017 = vadd.f32 %v979, 1.0
        %v1018 = vadd.f32 %v981, 1.0
        %v1019 = vadd.f32 %v983, 1.0
        %v1020 = vadd.f32 %v985, 1.0
        %v1021 = vadd.f32 %v987, 1.0
        %v1022 = vadd.f32 %v989, 1.0
        %v1023 = vadd.f32 %v991, 1.0
        %v1024 = vrcp.pop %v992
        %v1025 = vmul.f32 1.0, %v1024
        %v1026 = vrcp.pop %v993
        %v1027 = vmul.f32 1.0, %v1026
        %v1028 = vrcp.pop %v994
        %v1029 = vmul.f32 1.0, %v1028
        %v1030 = vrcp.pop %v995
        %v1031 = vmul.f32 1.0, %v1030
        %v1032 = vrcp.pop %v996
        %v1033 = vmul.f32 1.0, %v1032
        %v1034 = vrcp.pop %v997
        %v1035 = vmul.f32 1.0, %v1034
        %v1036 = vrcp.pop %v998
        %v1037 = vmul.f32 1.0, %v1036
        %v1038 = vrcp.pop %v999
        %v1039 = vmul.f32 1.0, %v1038
        %v1040 = vrcp.pop %v1000
        %v1041 = vmul.f32 1.0, %v1040
        %v1042 = vrcp.pop %v1001
        %v1043 = vmul.f32 1.0, %v1042
        %v1044 = vrcp.pop %v1002
        %v1045 = vmul.f32 1.0, %v1044
        %v1046 = vrcp.pop %v1003
        %v1047 = vmul.f32 1.0, %v1046
        %v1048 = vrcp.pop %v1004
        %v1049 = vmul.f32 1.0, %v1048
        %v1050 = vrcp.pop %v1005
        %v1051 = vmul.f32 1.0, %v1050
        %v1052 = vrcp.pop %v1006
        %v1053 = vmul.f32 1.0, %v1052
        %v1054 = vrcp.pop %v1007
        %v1055 = vmul.f32 1.0, %v1054
        %v1056 = vrcp.pop %v1008
        %v1057 = vmul.f32 1.0, %v1056
        %v1058 = vrcp.pop %v1009
        %v1059 = vmul.f32 1.0, %v1058
        %v1060 = vrcp.pop %v1010
        %v1061 = vmul.f32 1.0, %v1060
        %v1062 = vrcp.pop %v1011
        %v1063 = vmul.f32 1.0, %v1062
        %v1064 = vrcp.pop %v1012
        %v1065 = vmul.f32 1.0, %v1064
        %v1066 = vrcp.pop %v1013
        %v1067 = vmul.f32 1.0, %v1066
        %v1068 = vrcp.pop %v1014
        %v1069 = vmul.f32 1.0, %v1068
        %v1070 = vrcp.pop %v1015
        %v1071 = vmul.f32 1.0, %v1070
        %v1072 = vrcp.pop %v1016
        %v1073 = vmul.f32 1.0, %v1072
        %v1074 = vrcp.pop %v1017
        %v1075 = vmul.f32 1.0, %v1074
        %v1076 = vrcp.pop %v1018
        %v1077 = vmul.f32 1.0, %v1076
        %v1078 = vrcp.pop %v1019
        %v1079 = vmul.f32 1.0, %v1078
        %v1080 = vrcp.pop %v1020
        %v1081 = vmul.f32 1.0, %v1080
        %v1082 = vrcp.pop %v1021
        %v1083 = vmul.f32 1.0, %v1082
        %v1084 = vrcp.pop %v1022
        %v1085 = vmul.f32 1.0, %v1084
        %v1086 = vrcp.pop %v1023
        %v1087 = vmul.f32 1.0, %v1086
        %v1088 = vmul.f32 %v577, %v1025
        %v1089 = vmul.f32 %v579, %v1027
        %v1090 = vmul.f32 %v583, %v1029
        %v1091 = vmul.f32 %v585, %v1031
        %v1092 = vmul.f32 %v589, %v1033
        %v1093 = vmul.f32 %v591, %v1035
        %v1094 = vmul.f32 %v595, %v1037
        %v1095 = vmul.f32 %v597, %v1039
        %v1096 = vmul.f32 %v601, %v1041
        %v1097 = vmul.f32 %v603, %v1043
        %v1098 = vmul.f32 %v607, %v1045
        %v1099 = vmul.f32 %v609, %v1047
        %v1100 = vmul.f32 %v613, %v1049
        %v1101 = vmul.f32 %v615, %v1051
        %v1102 = vmul.f32 %v619, %v1053
        %v1103 = vmul.f32 %v621, %v1055
        %v1104 = vmul.f32 %v625, %v1057
        %v1105 = vmul.f32 %v627, %v1059
        %v1106 = vmul.f32 %v631, %v1061
        %v1107 = vmul.f32 %v633, %v1063
        %v1108 = vmul.f32 %v637, %v1065
        %v1109 = vmul.f32 %v639, %v1067
        %v1110 = vmul.f32 %v643, %v1069
        %v1111 = vmul.f32 %v645, %v1071
        %v1112 = vmul.f32 %v649, %v1073
        %v1113 = vmul.f32 %v651, %v1075
        %v1114 = vmul.f32 %v655, %v1077
        %v1115 = vmul.f32 %v657, %v1079
        %v1116 = vmul.f32 %v661, %v1081
        %v1117 = vmul.f32 %v663, %v1083
        %v1118 = vmul.f32 %v667, %v1085
        %v1119 = vmul.f32 %v669, %v1087
        %v1120 = vmul.f32 %v1088, %v802
        %v1121 = vmul.f32 %v1089, %v804
        %v1122 = vmul.f32 %v1090, %v808
        %v1123 = vmul.f32 %v1091, %v810
        %v1124 = vmul.f32 %v1092, %v814
        %v1125 = vmul.f32 %v1093, %v816
        %v1126 = vmul.f32 %v1094, %v820
        %v1127 = vmul.f32 %v1095, %v822
        %v1128 = vmul.f32 %v1096, %v826
        %v1129 = vmul.f32 %v1097, %v828
        %v1130 = vmul.f32 %v1098, %v832
        %v1131 = vmul.f32 %v1099, %v834
        %v1132 = vmul.f32 %v1100, %v838
        %v1133 = vmul.f32 %v1101, %v840
        %v1134 = vmul.f32 %v1102, %v844
        %v1135 = vmul.f32 %v1103, %v846
        %v1136 = vmul.f32 %v1104, %v850
        %v1137 = vmul.f32 %v1105, %v852
        %v1138 = vmul.f32 %v1106, %v856
        %v1139 = vmul.f32 %v1107, %v858
        %v1140 = vmul.f32 %v1108, %v862
        %v1141 = vmul.f32 %v1109, %v864
        %v1142 = vmul.f32 %v1110, %v868
        %v1143 = vmul.f32 %v1111, %v870
        %v1144 = vmul.f32 %v1112, %v874
        %v1145 = vmul.f32 %v1113, %v876
        %v1146 = vmul.f32 %v1114, %v880
        %v1147 = vmul.f32 %v1115, %v882
        %v1148 = vmul.f32 %v1116, %v886
        %v1149 = vmul.f32 %v1117, %v888
        %v1150 = vmul.f32 %v1118, %v892
        %v1151 = vmul.f32 %v1119, %v894
        %v1152 = vld [vmem:[%s351] sm:$0xff]
        %v1153 = vld [vmem:[%s351 + $0x8] sm:$0xff]
        %v1154 = vld [vmem:[%s351 + $0x10] sm:$0xff]
        %v1155 = vld [vmem:[%s351 + $0x18] sm:$0xff]
        %v1156 = vld [vmem:[%s351 + $0x20] sm:$0xff]
        %v1157 = vld [vmem:[%s351 + $0x28] sm:$0xff]
        %v1158 = vld [vmem:[%s351 + $0x30] sm:$0xff]
        %v1159 = vld [vmem:[%s351 + $0x38] sm:$0xff]
        %v1160 = vld [vmem:[%s351 + $0x40] sm:$0xff]
        %v1161 = vld [vmem:[%s351 + $0x48] sm:$0xff]
        %v1162 = vld [vmem:[%s351 + $0x50] sm:$0xff]
        %v1163 = vld [vmem:[%s351 + $0x58] sm:$0xff]
        %v1164 = vld [vmem:[%s351 + $0x60] sm:$0xff]
        %v1165 = vld [vmem:[%s351 + $0x68] sm:$0xff]
        %v1166 = vld [vmem:[%s351 + $0x70] sm:$0xff]
        %v1167 = vld [vmem:[%s351 + $0x78] sm:$0xff]
        %v1168 = vld [vmem:[%s351 + $0x80] sm:$0xff]
        %v1169 = vld [vmem:[%s351 + $0x88] sm:$0xff]
        %v1170 = vld [vmem:[%s351 + $0x90] sm:$0xff]
        %v1171 = vld [vmem:[%s351 + $0x98] sm:$0xff]
        %v1172 = vld [vmem:[%s351 + $0xa0] sm:$0xff]
        %v1173 = vld [vmem:[%s351 + $0xa8] sm:$0xff]
        %v1174 = vld [vmem:[%s351 + $0xb0] sm:$0xff]
        %v1175 = vld [vmem:[%s351 + $0xb8] sm:$0xff]
        %v1176 = vld [vmem:[%s351 + $0xc0] sm:$0xff]
        %v1177 = vld [vmem:[%s351 + $0xc8] sm:$0xff]
        %v1178 = vld [vmem:[%s351 + $0xd0] sm:$0xff]
        %v1179 = vld [vmem:[%s351 + $0xd8] sm:$0xff]
        %v1180 = vld [vmem:[%s351 + $0xe0] sm:$0xff]
        %v1181 = vld [vmem:[%s351 + $0xe8] sm:$0xff]
        %v1182 = vld [vmem:[%s351 + $0xf0] sm:$0xff]
        %v1183 = vld [vmem:[%s351 + $0xf8] sm:$0xff]
        %v1184 = vld [vmem:[%s351 + $0x100] sm:$0xff]
        %v1185 = vld [vmem:[%s351 + $0x108] sm:$0xff]
        %v1186 = vld [vmem:[%s351 + $0x110] sm:$0xff]
        %v1187 = vld [vmem:[%s351 + $0x118] sm:$0xff]
        %v1188 = vld [vmem:[%s351 + $0x120] sm:$0xff]
        %v1189 = vld [vmem:[%s351 + $0x128] sm:$0xff]
        %v1190 = vld [vmem:[%s351 + $0x130] sm:$0xff]
        %v1191 = vld [vmem:[%s351 + $0x138] sm:$0xff]
        %v1192 = vld [vmem:[%s351 + $0x140] sm:$0xff]
        %v1193 = vld [vmem:[%s351 + $0x148] sm:$0xff]
        %v1194 = vld [vmem:[%s351 + $0x150] sm:$0xff]
        %v1195 = vld [vmem:[%s351 + $0x158] sm:$0xff]
        %v1196 = vld [vmem:[%s351 + $0x160] sm:$0xff]
        %v1197 = vld [vmem:[%s351 + $0x168] sm:$0xff]
        %v1198 = vld [vmem:[%s351 + $0x170] sm:$0xff]
        %v1199 = vld [vmem:[%s351 + $0x178] sm:$0xff]
        %v1200 = vld [vmem:[%s351 + $0x180] sm:$0xff]
        %v1201 = vld [vmem:[%s351 + $0x188] sm:$0xff]
        %v1202 = vld [vmem:[%s351 + $0x190] sm:$0xff]
        %v1203 = vld [vmem:[%s351 + $0x198] sm:$0xff]
        %v1204 = vld [vmem:[%s351 + $0x1a0] sm:$0xff]
        %v1205 = vld [vmem:[%s351 + $0x1a8] sm:$0xff]
        %v1206 = vld [vmem:[%s351 + $0x1b0] sm:$0xff]
        %v1207 = vld [vmem:[%s351 + $0x1b8] sm:$0xff]
        %v1208 = vld [vmem:[%s351 + $0x1c0] sm:$0xff]
        %v1209 = vld [vmem:[%s351 + $0x1c8] sm:$0xff]
        %v1210 = vld [vmem:[%s351 + $0x1d0] sm:$0xff]
        %v1211 = vld [vmem:[%s351 + $0x1d8] sm:$0xff]
        %v1212 = vld [vmem:[%s351 + $0x1e0] sm:$0xff]
        %v1213 = vld [vmem:[%s351 + $0x1e8] sm:$0xff]
        %v1214 = vld [vmem:[%s351 + $0x1f0] sm:$0xff]
        %v1215 = vld [vmem:[%s351 + $0x1f8] sm:$0xff]
        %1216 = vmatprep.subr.mxu0 %v1153
        %1217 = vmatpush1.xpose.msra.mxu0 %v1152
        %1218 = vmatprep.subr.mxu0 %v1155
        %1219 = vmatpush1.xpose.msra.mxu0 %v1154
        %1220 = vmatprep.subr.mxu0 %v1157
        %1221 = vmatpush1.xpose.msra.mxu0 %v1156
        %1222 = vmatprep.subr.mxu0 %v1159
        %1223 = vmatpush1.xpose.msra.mxu0 %v1158
        %1224 = vmatprep.subr.mxu0 %v1161
        %1225 = vmatpush1.xpose.msra.mxu0 %v1160
        %1226 = vmatprep.subr.mxu0 %v1163
        %1227 = vmatpush1.xpose.msra.mxu0 %v1162
        %1228 = vmatprep.subr.mxu0 %v1165
        %1229 = vmatpush1.xpose.msra.mxu0 %v1164
        %1230 = vmatprep.subr.mxu0 %v1167
        %1231 = vmatpush1.xpose.msra.mxu0 %v1166
        %1232 = vmatprep.subr.mxu0 %v1169
        %1233 = vmatpush1.xpose.msra.mxu0 %v1168
        %1234 = vmatprep.subr.mxu0 %v1171
        %1235 = vmatpush1.xpose.msra.mxu0 %v1170
        %1236 = vmatprep.subr.mxu0 %v1173
        %1237 = vmatpush1.xpose.msra.mxu0 %v1172
        %1238 = vmatprep.subr.mxu0 %v1175
        %1239 = vmatpush1.xpose.msra.mxu0 %v1174
        %1240 = vmatprep.subr.mxu0 %v1177
        %1241 = vmatpush1.xpose.msra.mxu0 %v1176
        %1242 = vmatprep.subr.mxu0 %v1179
        %1243 = vmatpush1.xpose.msra.mxu0 %v1178
        %1244 = vmatprep.subr.mxu0 %v1181
        %1245 = vmatpush1.xpose.msra.mxu0 %v1180
        %1246 = vmatprep.subr.mxu0 %v1183
        %1247 = vmatpush1.xpose.msra.mxu0 %v1182
        %1248 = vmatprep.subr.mxu0 %v1185
        %1249 = vmatpush1.xpose.msra.mxu0 %v1184
        %1250 = vmatprep.subr.mxu0 %v1187
        %1251 = vmatpush1.xpose.msra.mxu0 %v1186
        %1252 = vmatprep.subr.mxu0 %v1189
        %1253 = vmatpush1.xpose.msra.mxu0 %v1188
        %1254 = vmatprep.subr.mxu0 %v1191
        %1255 = vmatpush1.xpose.msra.mxu0 %v1190
        %1256 = vmatprep.subr.mxu0 %v1193
        %1257 = vmatpush1.xpose.msra.mxu0 %v1192
        %1258 = vmatprep.subr.mxu0 %v1195
        %1259 = vmatpush1.xpose.msra.mxu0 %v1194
        %1260 = vmatprep.subr.mxu0 %v1197
        %1261 = vmatpush1.xpose.msra.mxu0 %v1196
        %1262 = vmatprep.subr.mxu0 %v1199
        %1263 = vmatpush1.xpose.msra.mxu0 %v1198
        %1264 = vmatprep.subr.mxu0 %v1201
        %1265 = vmatpush1.xpose.msra.mxu0 %v1200
        %1266 = vmatprep.subr.mxu0 %v1203
        %1267 = vmatpush1.xpose.msra.mxu0 %v1202
        %1268 = vmatprep.subr.mxu0 %v1205
        %1269 = vmatpush1.xpose.msra.mxu0 %v1204
        %1270 = vmatprep.subr.mxu0 %v1207
        %1271 = vmatpush1.xpose.msra.mxu0 %v1206
        %1272 = vmatprep.subr.mxu0 %v1209
        %1273 = vmatpush1.xpose.msra.mxu0 %v1208
        %1274 = vmatprep.subr.mxu0 %v1211
        %1275 = vmatpush1.xpose.msra.mxu0 %v1210
        %1276 = vmatprep.subr.mxu0 %v1213
        %1277 = vmatpush1.xpose.msra.mxu0 %v1212
        %1278 = vmatprep.subr.mxu0 %v1215
        %1279 = vmatpush1.xpose.msra.mxu0 %v1214
        %1280 = vmatprep.mubr.f32.mxu0 %v1121
        %1281 = vmatmul.mubr.f32.gmra.mrb[0].mxu0 %v1120
        %v1282 = vpop.f32.mrb[0].mxu0
        %v1283 = vadd.f32 0.0, %v1282
        %v1284 = vpop.f32.mrb[0].mxu0
        %v1285 = vadd.f32 0.0, %v1284
        %1286 = vmatprep.mubr.f32.mxu0 %v1123
        %1287 = vmatmul.mubr.f32.gmra.mrb[0].mxu0 %v1122
        %v1288 = vpop.f32.mrb[0].mxu0
        %v1289 = vadd.f32 0.0, %v1288
        %v1290 = vpop.f32.mrb[0].mxu0
        %v1291 = vadd.f32 0.0, %v1290
        %1292 = vmatprep.mubr.f32.mxu0 %v1125
        %1293 = vmatmul.mubr.f32.gmra.mrb[0].mxu0 %v1124
        %v1294 = vpop.f32.mrb[0].mxu0
        %v1295 = vadd.f32 0.0, %v1294
        %v1296 = vpop.f32.mrb[0].mxu0
        %v1297 = vadd.f32 0.0, %v1296
        %1298 = vmatprep.mubr.f32.mxu0 %v1127
        %1299 = vmatmul.mubr.f32.gmra.mrb[0].mxu0 %v1126
        %v1300 = vpop.f32.mrb[0].mxu0
        %v1301 = vadd.f32 0.0, %v1300
        %v1302 = vpop.f32.mrb[0].mxu0
        %v1303 = vadd.f32 0.0, %v1302
        %1304 = vmatprep.mubr.f32.mxu0 %v1129
        %1305 = vmatmul.mubr.f32.gmra.mrb[0].mxu0 %v1128
        %v1306 = vpop.f32.mrb[0].mxu0
        %v1307 = vadd.f32 0.0, %v1306
        %v1308 = vpop.f32.mrb[0].mxu0
        %v1309 = vadd.f32 0.0, %v1308
        %1310 = vmatprep.mubr.f32.mxu0 %v1131
        %1311 = vmatmul.mubr.f32.gmra.mrb[0].mxu0 %v1130
        %v1312 = vpop.f32.mrb[0].mxu0
        %v1313 = vadd.f32 0.0, %v1312
        %v1314 = vpop.f32.mrb[0].mxu0
        %v1315 = vadd.f32 0.0, %v1314
        %1316 = vmatprep.mubr.f32.mxu0 %v1133
        %1317 = vmatmul.mubr.f32.gmra.mrb[0].mxu0 %v1132
        %v1318 = vpop.f32.mrb[0].mxu0
        %v1319 = vadd.f32 0.0, %v1318
        %v1320 = vpop.f32.mrb[0].mxu0
        %v1321 = vadd.f32 0.0, %v1320
        %1322 = vmatprep.mubr.f32.mxu0 %v1135
        %1323 = vmatmul.mubr.f32.gmra.mrb[0].mxu0 %v1134
        %v1324 = vpop.f32.mrb[0].mxu0
        %v1325 = vadd.f32 0.0, %v1324
        %v1326 = vpop.f32.mrb[0].mxu0
        %v1327 = vadd.f32 0.0, %v1326
        %1328 = vmatprep.mubr.f32.mxu0 %v1137
        %1329 = vmatmul.mubr.f32.gmra.mrb[0].mxu0 %v1136
        %v1330 = vpop.f32.mrb[0].mxu0
        %v1331 = vadd.f32 0.0, %v1330
        %v1332 = vpop.f32.mrb[0].mxu0
        %v1333 = vadd.f32 0.0, %v1332
        %1334 = vmatprep.mubr.f32.mxu0 %v1139
        %1335 = vmatmul.mubr.f32.gmra.mrb[0].mxu0 %v1138
        %v1336 = vpop.f32.mrb[0].mxu0
        %v1337 = vadd.f32 0.0, %v1336
        %v1338 = vpop.f32.mrb[0].mxu0
        %v1339 = vadd.f32 0.0, %v1338
        %1340 = vmatprep.mubr.f32.mxu0 %v1141
        %1341 = vmatmul.mubr.f32.gmra.mrb[0].mxu0 %v1140
        %v1342 = vpop.f32.mrb[0].mxu0
        %v1343 = vadd.f32 0.0, %v1342
        %v1344 = vpop.f32.mrb[0].mxu0
        %v1345 = vadd.f32 0.0, %v1344
        %1346 = vmatprep.mubr.f32.mxu0 %v1143
        %1347 = vmatmul.mubr.f32.gmra.mrb[0].mxu0 %v1142
        %v1348 = vpop.f32.mrb[0].mxu0
        %v1349 = vadd.f32 0.0, %v1348
        %v1350 = vpop.f32.mrb[0].mxu0
        %v1351 = vadd.f32 0.0, %v1350
        %1352 = vmatprep.mubr.f32.mxu0 %v1145
        %1353 = vmatmul.mubr.f32.gmra.mrb[0].mxu0 %v1144
        %v1354 = vpop.f32.mrb[0].mxu0
        %v1355 = vadd.f32 0.0, %v1354
        %v1356 = vpop.f32.mrb[0].mxu0
        %v1357 = vadd.f32 0.0, %v1356
        %1358 = vmatprep.mubr.f32.mxu0 %v1147
        %1359 = vmatmul.mubr.f32.gmra.mrb[0].mxu0 %v1146
        %v1360 = vpop.f32.mrb[0].mxu0
        %v1361 = vadd.f32 0.0, %v1360
        %v1362 = vpop.f32.mrb[0].mxu0
        %v1363 = vadd.f32 0.0, %v1362
        %1364 = vmatprep.mubr.f32.mxu0 %v1149
        %1365 = vmatmul.mubr.f32.gmra.mrb[0].mxu0 %v1148
        %v1366 = vpop.f32.mrb[0].mxu0
        %v1367 = vadd.f32 0.0, %v1366
        %v1368 = vpop.f32.mrb[0].mxu0
        %v1369 = vadd.f32 0.0, %v1368
        %1370 = vmatprep.mubr.f32.mxu0 %v1151
        %1371 = vmatmul.mubr.f32.gmra.mrb[0].mxu0 %v1150
        %v1372 = vpop.f32.mrb[0].mxu0
        %v1373 = vadd.f32 0.0, %v1372
        %v1374 = vpop.f32.mrb[0].mxu0
        %v1375 = vadd.f32 0.0, %v1374
        %1376 = vdwg.mxu0
        %p1377 = scmp.eq.s32.totalorder %s36, 0
        // Predicated region
        $region53: #{_qwen2_mlp_nd_impl.1} parent=35 // pred_check
          %p1378 = pneg %p1377
        $region54: #{_qwen2_mlp_nd_impl.1} parent=35 // pred_check_branch
          %1380 = sbr.rel (%p1378) target = $region56
        $region55: #{_qwen2_mlp_nd_impl.1} parent=35 // pred_region
          %1381 = vst [vmem:[#allocation2] sm:$0xff] %v1283
          %1382 = vst [vmem:[#allocation2 + $0x8] sm:$0xff] %v1285
          %1383 = vst [vmem:[#allocation2 + $0x10] sm:$0xff] %v1289
          %1384 = vst [vmem:[#allocation2 + $0x18] sm:$0xff] %v1291
          %1385 = vst [vmem:[#allocation2 + $0x20] sm:$0xff] %v1295
          %1386 = vst [vmem:[#allocation2 + $0x28] sm:$0xff] %v1297
          %1387 = vst [vmem:[#allocation2 + $0x30] sm:$0xff] %v1301
          %1388 = vst [vmem:[#allocation2 + $0x38] sm:$0xff] %v1303
          %1389 = vst [vmem:[#allocation2 + $0x40] sm:$0xff] %v1307
          %1390 = vst [vmem:[#allocation2 + $0x48] sm:$0xff] %v1309
          %1391 = vst [vmem:[#allocation2 + $0x50] sm:$0xff] %v1313
          %1392 = vst [vmem:[#allocation2 + $0x58] sm:$0xff] %v1315
          %1393 = vst [vmem:[#allocation2 + $0x60] sm:$0xff] %v1319
          %1394 = vst [vmem:[#allocation2 + $0x68] sm:$0xff] %v1321
          %1395 = vst [vmem:[#allocation2 + $0x70] sm:$0xff] %v1325
          %1396 = vst [vmem:[#allocation2 + $0x78] sm:$0xff] %v1327
          %1397 = vst [vmem:[#allocation2 + $0x80] sm:$0xff] %v1331
          %1398 = vst [vmem:[#allocation2 + $0x88] sm:$0xff] %v1333
          %1399 = vst [vmem:[#allocation2 + $0x90] sm:$0xff] %v1337
          %1400 = vst [vmem:[#allocation2 + $0x98] sm:$0xff] %v1339
          %1401 = vst [vmem:[#allocation2 + $0xa0] sm:$0xff] %v1343
          %1402 = vst [vmem:[#allocation2 + $0xa8] sm:$0xff] %v1345
          %1403 = vst [vmem:[#allocation2 + $0xb0] sm:$0xff] %v1349
          %1404 = vst [vmem:[#allocation2 + $0xb8] sm:$0xff] %v1351
          %1405 = vst [vmem:[#allocation2 + $0xc0] sm:$0xff] %v1355
          %1406 = vst [vmem:[#allocation2 + $0xc8] sm:$0xff] %v1357
          %1407 = vst [vmem:[#allocation2 + $0xd0] sm:$0xff] %v1361
          %1408 = vst [vmem:[#allocation2 + $0xd8] sm:$0xff] %v1363
          %1409 = vst [vmem:[#allocation2 + $0xe0] sm:$0xff] %v1367
          %1410 = vst [vmem:[#allocation2 + $0xe8] sm:$0xff] %v1369
          %1411 = vst [vmem:[#allocation2 + $0xf0] sm:$0xff] %v1373
          %1412 = vst [vmem:[#allocation2 + $0xf8] sm:$0xff] %v1375
        $region56: #{_qwen2_mlp_nd_impl.1} parent=35 // pred_fallthru
          _
        %p1413 = scmp.gt.s32.totalorder %s36, 0
        // Predicated region
        $region57: #{_qwen2_mlp_nd_impl.1} parent=35 // pred_check
          %p1414 = pneg %p1413
        $region58: #{_qwen2_mlp_nd_impl.1} parent=35 // pred_check_branch
          %1416 = sbr.rel (%p1414) target = $region60
        $region59: #{_qwen2_mlp_nd_impl.1} parent=35 // pred_region
          %v1417 = vld [vmem:[#allocation2] sm:$0xff]
          %v1418 = vld [vmem:[#allocation2 + $0x8] sm:$0xff]
          %v1419 = vld [vmem:[#allocation2 + $0x10] sm:$0xff]
          %v1420 = vld [vmem:[#allocation2 + $0x18] sm:$0xff]
          %v1421 = vld [vmem:[#allocation2 + $0x20] sm:$0xff]
          %v1422 = vld [vmem:[#allocation2 + $0x28] sm:$0xff]
          %v1423 = vld [vmem:[#allocation2 + $0x30] sm:$0xff]
          %v1424 = vld [vmem:[#allocation2 + $0x38] sm:$0xff]
          %v1425 = vld [vmem:[#allocation2 + $0x40] sm:$0xff]
          %v1426 = vld [vmem:[#allocation2 + $0x48] sm:$0xff]
          %v1427 = vld [vmem:[#allocation2 + $0x50] sm:$0xff]
          %v1428 = vld [vmem:[#allocation2 + $0x58] sm:$0xff]
          %v1429 = vld [vmem:[#allocation2 + $0x60] sm:$0xff]
          %v1430 = vld [vmem:[#allocation2 + $0x68] sm:$0xff]
          %v1431 = vld [vmem:[#allocation2 + $0x70] sm:$0xff]
          %v1432 = vld [vmem:[#allocation2 + $0x78] sm:$0xff]
          %v1433 = vld [vmem:[#allocation2 + $0x80] sm:$0xff]
          %v1434 = vld [vmem:[#allocation2 + $0x88] sm:$0xff]
          %v1435 = vld [vmem:[#allocation2 + $0x90] sm:$0xff]
          %v1436 = vld [vmem:[#allocation2 + $0x98] sm:$0xff]
          %v1437 = vld [vmem:[#allocation2 + $0xa0] sm:$0xff]
          %v1438 = vld [vmem:[#allocation2 + $0xa8] sm:$0xff]
          %v1439 = vld [vmem:[#allocation2 + $0xb0] sm:$0xff]
          %v1440 = vld [vmem:[#allocation2 + $0xb8] sm:$0xff]
          %v1441 = vld [vmem:[#allocation2 + $0xc0] sm:$0xff]
          %v1442 = vld [vmem:[#allocation2 + $0xc8] sm:$0xff]
          %v1443 = vld [vmem:[#allocation2 + $0xd0] sm:$0xff]
          %v1444 = vld [vmem:[#allocation2 + $0xd8] sm:$0xff]
          %v1445 = vld [vmem:[#allocation2 + $0xe0] sm:$0xff]
          %v1446 = vld [vmem:[#allocation2 + $0xe8] sm:$0xff]
          %v1447 = vld [vmem:[#allocation2 + $0xf0] sm:$0xff]
          %v1448 = vld [vmem:[#allocation2 + $0xf8] sm:$0xff]
          %v1449 = vadd.f32 %v1417, %v1283
          %v1450 = vadd.f32 %v1418, %v1285
          %v1451 = vadd.f32 %v1419, %v1289
          %v1452 = vadd.f32 %v1420, %v1291
          %v1453 = vadd.f32 %v1421, %v1295
          %v1454 = vadd.f32 %v1422, %v1297
          %v1455 = vadd.f32 %v1423, %v1301
          %v1456 = vadd.f32 %v1424, %v1303
          %v1457 = vadd.f32 %v1425, %v1307
          %v1458 = vadd.f32 %v1426, %v1309
          %v1459 = vadd.f32 %v1427, %v1313
          %v1460 = vadd.f32 %v1428, %v1315
          %v1461 = vadd.f32 %v1429, %v1319
          %v1462 = vadd.f32 %v1430, %v1321
          %v1463 = vadd.f32 %v1431, %v1325
          %v1464 = vadd.f32 %v1432, %v1327
          %v1465 = vadd.f32 %v1433, %v1331
          %v1466 = vadd.f32 %v1434, %v1333
          %v1467 = vadd.f32 %v1435, %v1337
          %v1468 = vadd.f32 %v1436, %v1339
          %v1469 = vadd.f32 %v1437, %v1343
          %v1470 = vadd.f32 %v1438, %v1345
          %v1471 = vadd.f32 %v1439, %v1349
          %v1472 = vadd.f32 %v1440, %v1351
          %v1473 = vadd.f32 %v1441, %v1355
          %v1474 = vadd.f32 %v1442, %v1357
          %v1475 = vadd.f32 %v1443, %v1361
          %v1476 = vadd.f32 %v1444, %v1363
          %v1477 = vadd.f32 %v1445, %v1367
          %v1478 = vadd.f32 %v1446, %v1369
          %v1479 = vadd.f32 %v1447, %v1373
          %v1480 = vadd.f32 %v1448, %v1375
          %1481 = vst [vmem:[#allocation2] sm:$0xff] %v1449
          %1482 = vst [vmem:[#allocation2 + $0x8] sm:$0xff] %v1450
          %1483 = vst [vmem:[#allocation2 + $0x10] sm:$0xff] %v1451
          %1484 = vst [vmem:[#allocation2 + $0x18] sm:$0xff] %v1452
          %1485 = vst [vmem:[#allocation2 + $0x20] sm:$0xff] %v1453
          %1486 = vst [vmem:[#allocation2 + $0x28] sm:$0xff] %v1454
          %1487 = vst [vmem:[#allocation2 + $0x30] sm:$0xff] %v1455
          %1488 = vst [vmem:[#allocation2 + $0x38] sm:$0xff] %v1456
          %1489 = vst [vmem:[#allocation2 + $0x40] sm:$0xff] %v1457
          %1490 = vst [vmem:[#allocation2 + $0x48] sm:$0xff] %v1458
          %1491 = vst [vmem:[#allocation2 + $0x50] sm:$0xff] %v1459
          %1492 = vst [vmem:[#allocation2 + $0x58] sm:$0xff] %v1460
          %1493 = vst [vmem:[#allocation2 + $0x60] sm:$0xff] %v1461
          %1494 = vst [vmem:[#allocation2 + $0x68] sm:$0xff] %v1462
          %1495 = vst [vmem:[#allocation2 + $0x70] sm:$0xff] %v1463
          %1496 = vst [vmem:[#allocation2 + $0x78] sm:$0xff] %v1464
          %1497 = vst [vmem:[#allocation2 + $0x80] sm:$0xff] %v1465
          %1498 = vst [vmem:[#allocation2 + $0x88] sm:$0xff] %v1466
          %1499 = vst [vmem:[#allocation2 + $0x90] sm:$0xff] %v1467
          %1500 = vst [vmem:[#allocation2 + $0x98] sm:$0xff] %v1468
          %1501 = vst [vmem:[#allocation2 + $0xa0] sm:$0xff] %v1469
          %1502 = vst [vmem:[#allocation2 + $0xa8] sm:$0xff] %v1470
          %1503 = vst [vmem:[#allocation2 + $0xb0] sm:$0xff] %v1471
          %1504 = vst [vmem:[#allocation2 + $0xb8] sm:$0xff] %v1472
          %1505 = vst [vmem:[#allocation2 + $0xc0] sm:$0xff] %v1473
          %1506 = vst [vmem:[#allocation2 + $0xc8] sm:$0xff] %v1474
          %1507 = vst [vmem:[#allocation2 + $0xd0] sm:$0xff] %v1475
          %1508 = vst [vmem:[#allocation2 + $0xd8] sm:$0xff] %v1476
          %1509 = vst [vmem:[#allocation2 + $0xe0] sm:$0xff] %v1477
          %1510 = vst [vmem:[#allocation2 + $0xe8] sm:$0xff] %v1478
          %1511 = vst [vmem:[#allocation2 + $0xf0] sm:$0xff] %v1479
          %1512 = vst [vmem:[#allocation2 + $0xf8] sm:$0xff] %v1480
        $region60: #{_qwen2_mlp_nd_impl.1} parent=35 // pred_fallthru
          _
        %p1513 = scmp.eq.s32.totalorder %s36, 1
        // Predicated region
        $region61: #{_qwen2_mlp_nd_impl.1} parent=35 // pred_check
          %p1514 = pneg %p1513
        $region62: #{_qwen2_mlp_nd_impl.1} parent=35 // pred_check_branch
          %1516 = sbr.rel (%p1514) target = $region64
        $region63: #{_qwen2_mlp_nd_impl.1} parent=35 // pred_region
          %v1517 = vld [vmem:[#allocation2] sm:$0xff]
          %v1518 = vld [vmem:[#allocation2 + $0x8] sm:$0xff]
          %v1519 = vld [vmem:[#allocation2 + $0x10] sm:$0xff]
          %v1520 = vld [vmem:[#allocation2 + $0x18] sm:$0xff]
          %v1521 = vld [vmem:[#allocation2 + $0x20] sm:$0xff]
          %v1522 = vld [vmem:[#allocation2 + $0x28] sm:$0xff]
          %v1523 = vld [vmem:[#allocation2 + $0x30] sm:$0xff]
          %v1524 = vld [vmem:[#allocation2 + $0x38] sm:$0xff]
          %v1525 = vld [vmem:[#allocation2 + $0x40] sm:$0xff]
          %v1526 = vld [vmem:[#allocation2 + $0x48] sm:$0xff]
          %v1527 = vld [vmem:[#allocation2 + $0x50] sm:$0xff]
          %v1528 = vld [vmem:[#allocation2 + $0x58] sm:$0xff]
          %v1529 = vld [vmem:[#allocation2 + $0x60] sm:$0xff]
          %v1530 = vld [vmem:[#allocation2 + $0x68] sm:$0xff]
          %v1531 = vld [vmem:[#allocation2 + $0x70] sm:$0xff]
          %v1532 = vld [vmem:[#allocation2 + $0x78] sm:$0xff]
          %v1533 = vld [vmem:[#allocation2 + $0x80] sm:$0xff]
          %v1534 = vld [vmem:[#allocation2 + $0x88] sm:$0xff]
          %v1535 = vld [vmem:[#allocation2 + $0x90] sm:$0xff]
          %v1536 = vld [vmem:[#allocation2 + $0x98] sm:$0xff]
          %v1537 = vld [vmem:[#allocation2 + $0xa0] sm:$0xff]
          %v1538 = vld [vmem:[#allocation2 + $0xa8] sm:$0xff]
          %v1539 = vld [vmem:[#allocation2 + $0xb0] sm:$0xff]
          %v1540 = vld [vmem:[#allocation2 + $0xb8] sm:$0xff]
          %v1541 = vld [vmem:[#allocation2 + $0xc0] sm:$0xff]
          %v1542 = vld [vmem:[#allocation2 + $0xc8] sm:$0xff]
          %v1543 = vld [vmem:[#allocation2 + $0xd0] sm:$0xff]
          %v1544 = vld [vmem:[#allocation2 + $0xd8] sm:$0xff]
          %v1545 = vld [vmem:[#allocation2 + $0xe0] sm:$0xff]
          %v1546 = vld [vmem:[#allocation2 + $0xe8] sm:$0xff]
          %v1547 = vld [vmem:[#allocation2 + $0xf0] sm:$0xff]
          %v1548 = vld [vmem:[#allocation2 + $0xf8] sm:$0xff]
          %1549 = vst [vmem:[%s390] sm:$0xff] %v1517
          %1550 = vst [vmem:[%s390 + $0x8] sm:$0xff] %v1518
          %1551 = vst [vmem:[%s390 + $0x10] sm:$0xff] %v1519
          %1552 = vst [vmem:[%s390 + $0x18] sm:$0xff] %v1520
          %1553 = vst [vmem:[%s390 + $0x20] sm:$0xff] %v1521
          %1554 = vst [vmem:[%s390 + $0x28] sm:$0xff] %v1522
          %1555 = vst [vmem:[%s390 + $0x30] sm:$0xff] %v1523
          %1556 = vst [vmem:[%s390 + $0x38] sm:$0xff] %v1524
          %1557 = vst [vmem:[%s390 + $0x40] sm:$0xff] %v1525
          %1558 = vst [vmem:[%s390 + $0x48] sm:$0xff] %v1526
          %1559 = vst [vmem:[%s390 + $0x50] sm:$0xff] %v1527
          %1560 = vst [vmem:[%s390 + $0x58] sm:$0xff] %v1528
          %1561 = vst [vmem:[%s390 + $0x60] sm:$0xff] %v1529
          %1562 = vst [vmem:[%s390 + $0x68] sm:$0xff] %v1530
          %1563 = vst [vmem:[%s390 + $0x70] sm:$0xff] %v1531
          %1564 = vst [vmem:[%s390 + $0x78] sm:$0xff] %v1532
          %1565 = vst [vmem:[%s390 + $0x80] sm:$0xff] %v1533
          %1566 = vst [vmem:[%s390 + $0x88] sm:$0xff] %v1534
          %1567 = vst [vmem:[%s390 + $0x90] sm:$0xff] %v1535
          %1568 = vst [vmem:[%s390 + $0x98] sm:$0xff] %v1536
          %1569 = vst [vmem:[%s390 + $0xa0] sm:$0xff] %v1537
          %1570 = vst [vmem:[%s390 + $0xa8] sm:$0xff] %v1538
          %1571 = vst [vmem:[%s390 + $0xb0] sm:$0xff] %v1539
          %1572 = vst [vmem:[%s390 + $0xb8] sm:$0xff] %v1540
          %1573 = vst [vmem:[%s390 + $0xc0] sm:$0xff] %v1541
          %1574 = vst [vmem:[%s390 + $0xc8] sm:$0xff] %v1542
          %1575 = vst [vmem:[%s390 + $0xd0] sm:$0xff] %v1543
          %1576 = vst [vmem:[%s390 + $0xd8] sm:$0xff] %v1544
          %1577 = vst [vmem:[%s390 + $0xe0] sm:$0xff] %v1545
          %1578 = vst [vmem:[%s390 + $0xe8] sm:$0xff] %v1546
          %1579 = vst [vmem:[%s390 + $0xf0] sm:$0xff] %v1547
          %1580 = vst [vmem:[%s390 + $0xf8] sm:$0xff] %v1548
        $region64: #{_qwen2_mlp_nd_impl.1} parent=35 // pred_fallthru
          _
        %v1581 = vmul.f32 %v1120, %v1120
        %v1582 = vmul.f32 %v1121, %v1121
        %v1583 = vmul.f32 %v1122, %v1122
        %v1584 = vmul.f32 %v1123, %v1123
        %v1585 = vmul.f32 %v1124, %v1124
        %v1586 = vmul.f32 %v1125, %v1125
        %v1587 = vmul.f32 %v1126, %v1126
        %v1588 = vmul.f32 %v1127, %v1127
        %v1589 = vmul.f32 %v1128, %v1128
        %v1590 = vmul.f32 %v1129, %v1129
        %v1591 = vmul.f32 %v1130, %v1130
        %v1592 = vmul.f32 %v1131, %v1131
        %v1593 = vmul.f32 %v1132, %v1132
        %v1594 = vmul.f32 %v1133, %v1133
        %v1595 = vmul.f32 %v1134, %v1134
        %v1596 = vmul.f32 %v1135, %v1135
        %v1597 = vmul.f32 %v1136, %v1136
        %v1598 = vmul.f32 %v1137, %v1137
        %v1599 = vmul.f32 %v1138, %v1138
        %v1600 = vmul.f32 %v1139, %v1139
        %v1601 = vmul.f32 %v1140, %v1140
        %v1602 = vmul.f32 %v1141, %v1141
        %v1603 = vmul.f32 %v1142, %v1142
        %v1604 = vmul.f32 %v1143, %v1143
        %v1605 = vmul.f32 %v1144, %v1144
        %v1606 = vmul.f32 %v1145, %v1145
        %v1607 = vmul.f32 %v1146, %v1146
        %v1608 = vmul.f32 %v1147, %v1147
        %v1609 = vmul.f32 %v1148, %v1148
        %v1610 = vmul.f32 %v1149, %v1149
        %v1611 = vmul.f32 %v1150, %v1150
        %v1612 = vmul.f32 %v1151, %v1151
        %v1613 = vadd.f32 %v1581, %v1583
        %v1614 = vadd.f32 %v1613, %v1585
        %v1615 = vadd.f32 %v1614, %v1587
        %v1616 = vadd.f32 %v1615, %v1589
        %v1617 = vadd.f32 %v1616, %v1591
        %v1618 = vadd.f32 %v1617, %v1593
        %v1619 = vadd.f32 %v1618, %v1595
        %v1620 = vadd.f32 %v1619, %v1597
        %v1621 = vadd.f32 %v1620, %v1599
        %v1622 = vadd.f32 %v1621, %v1601
        %v1623 = vadd.f32 %v1622, %v1603
        %v1624 = vadd.f32 %v1623, %v1605
        %v1625 = vadd.f32 %v1624, %v1607
        %v1626 = vadd.f32 %v1625, %v1609
        %v1627 = vadd.f32 %v1626, %v1611
        %v1628 = vrot.slane %v1627, 4
        %v1629 = vadd.f32 %v1627, %v1628
        %v1630 = vrot.slane %v1629, 2
        %v1631 = vadd.f32 %v1629, %v1630
        %v1632 = vrot.slane %v1631, 1
        %v1633 = vadd.f32 %v1631, %v1632
        %v1634 = vadd.f32 %v1582, %v1584
        %v1635 = vadd.f32 %v1634, %v1586
        %v1636 = vadd.f32 %v1635, %v1588
        %v1637 = vadd.f32 %v1636, %v1590
        %v1638 = vadd.f32 %v1637, %v1592
        %v1639 = vadd.f32 %v1638, %v1594
        %v1640 = vadd.f32 %v1639, %v1596
        %v1641 = vadd.f32 %v1640, %v1598
        %v1642 = vadd.f32 %v1641, %v1600
        %v1643 = vadd.f32 %v1642, %v1602
        %v1644 = vadd.f32 %v1643, %v1604
        %v1645 = vadd.f32 %v1644, %v1606
        %v1646 = vadd.f32 %v1645, %v1608
        %v1647 = vadd.f32 %v1646, %v1610
        %v1648 = vadd.f32 %v1647, %v1612
        %v1649 = vrot.slane %v1648, 4
        %v1650 = vadd.f32 %v1648, %v1649
        %v1651 = vrot.slane %v1650, 2
        %v1652 = vadd.f32 %v1650, %v1651
        %v1653 = vrot.slane %v1652, 1
        %v1654 = vadd.f32 %v1652, %v1653
        %s1655 = smul.u32 %s36, 256
        %v1658 = vcombine.low %v1633, %v1654
        %v1660 = vunpack.c.l.s4 1966171168
        %v1661 = vunpack.c.0.s8 %v1660
        %v1662 = vlaneseq
        %v1663 = vshrl.u32 %v1662, 7
        %v1664 = vsub.s32 %v1661, %v1663
        %v1665 = vrot.slane %v1658, %v1664
        %v1667 = vunpack.c.l.s4 1966171168
        %v1668 = vunpack.c.0.s8 %v1667
        %v1669 = vlaneseq
        %v1670 = vshrl.u32 %v1669, 7
        %v1671 = vsub.s32 %v1668, %v1670
        %v1672 = vrot.slane %v1665, %v1671
        %s1674 = sshra.s32 %s1655, 7
        %s1675 = sand.u32 %s1655, 127
        %s1676 = scalar_lea.vmem %s413, %s1674
        %v1677 = vlaneseq
        %vm1678 = vcmp.ge.s32.totalorder %v1677, 0
        %vm1679 = vcmp.lt.s32.totalorder %v1677, 256
        %vm1680 = vmand %vm1678, %vm1679
        %1681 = vst.msk [vmem:[%s1676] sm:$0x3] %vm1680, %v1672
        %s1682 = sand.u32 %s164, 1
        %s1683 = scalar_lea.sflag [#allocation5], %s1682
        %s1684 = sand.u32 %s164, 1
        %s1685 = smul.addr %s1684, 256
        %s1686 = scalar_lea.vmem [#allocation11], %s1685
        %p1687 = scmp.lt.s32.totalorder %s34, 1
        %s1688 = scalar_select %p1687, %s34, 1
        %p1689 = scmp.lt.s32.totalorder %s35, 1
        %s1690 = scalar_select %p1689, %s35, 1
        %s1691 = smul.addr %s1690, 4
        %s1692 = smul.addr %s1688, 8
        %s1693 = sadd.s32 %s1691, %s1692
        %s1694 = scalar_lea.vmem %s5, %s1693
        // Predicated region
        $region65: #{_qwen2_mlp_nd_impl.1} parent=35 // pred_check
          %p1695 = pneg %p174
        $region66: #{_qwen2_mlp_nd_impl.1} parent=35 // pred_check_branch
          %1697 = sbr.rel (%p1695) target = $region68
        $region67: #{_qwen2_mlp_nd_impl.1} parent=35 // pred_region
          %s1698 = smul.u32 16, %s35
          %s1700 = ssub.s32 4096, 4096
          %1701 = vsyncadd %s1683, %s1700
          %s1702 = smul.addr %s1698, 2
          %s1703 = smul.addr %s34, 64
          %s1704 = sadd.s32 %s1702, %s1703
          %s1705 = smul.addr %s1704, 128
          %s1706 = scalar_lea.hbm %s4, %s1705
          %s1707 = sshll.u32 %s1686, 4
          %s1708 = int_to_ptr.vmem [resolvable:$true] %s1707
          %1713 = dma.vmem_to_hbm [thread:$0]  %s1708, 4096, %s1706, %s1683, 256, 256, 16
        $region68: #{_qwen2_mlp_nd_impl.1} parent=35 // pred_fallthru
          _
        // Predicated region
        $region69: #{_qwen2_mlp_nd_impl.1} parent=35 // pred_check
          %p1714 = pneg %p202
        $region70: #{_qwen2_mlp_nd_impl.1} parent=35 // pred_check_branch
          %1716 = sbr.rel (%p1714) target = $region72
        $region71: #{_qwen2_mlp_nd_impl.1} parent=35 // pred_region
          _
        $region72: #{_qwen2_mlp_nd_impl.1} parent=35 // pred_fallthru
          _
      $region36: #{_qwen2_mlp_nd_impl.1} parent=5 // pred_fallthru
        _
      %p1717 = scmp.le.s32.totalorder 2, %s24
      // Predicated region
      $region73: #{_qwen2_mlp_nd_impl.1} parent=5 // pred_check
        %p1718 = pneg %p1717
      $region74: #{_qwen2_mlp_nd_impl.1} parent=5 // pred_check_branch
        %1720 = sbr.rel (%p1718) target = $region76
      $region75: #{_qwen2_mlp_nd_impl.1} parent=5 // pred_region
        %s1721 = ssub.s32 %s24, 2
        // Predicated region
        $region77: #{_qwen2_mlp_nd_impl.1} parent=75 // pred_check
          %p1722 = pneg %p180
        $region78: #{_qwen2_mlp_nd_impl.1} parent=75 // pred_check_branch
          %1724 = sbr.rel (%p1722) target = $region80
        $region79: #{_qwen2_mlp_nd_impl.1} parent=75 // pred_region
          %s1725 = sand.u32 %s165, 1
          %s1726 = scalar_lea.sflag [#allocation5], %s1725
          %s1727 = sand.u32 %s165, 1
          %s1728 = smul.addr %s1727, 256
          %s1729 = scalar_lea.vmem [#allocation11], %s1728
          %1730 = dma.done %s1726, 4096
        $region80: #{_qwen2_mlp_nd_impl.1} parent=75 // pred_fallthru
          _
        // Predicated region
        $region81: #{_qwen2_mlp_nd_impl.1} parent=75 // pred_check
          %p1731 = pneg %p208
        $region82: #{_qwen2_mlp_nd_impl.1} parent=75 // pred_check_branch
          %1733 = sbr.rel (%p1731) target = $region84
        $region83: #{_qwen2_mlp_nd_impl.1} parent=75 // pred_region
          %p1734 = scmp.lt.s32.totalorder %s37, 1
          %s1735 = scalar_select %p1734, %s37, 1
          %p1736 = scmp.lt.s32.totalorder %s38, 1
          %s1737 = scalar_select %p1736, %s38, 1
          %s1738 = smul.addr %s1737, 4
          %s1739 = smul.addr %s1735, 8
          %s1740 = sadd.s32 %s1738, %s1739
          %s1741 = scalar_lea.vmem %s5, %s1740
        $region84: #{_qwen2_mlp_nd_impl.1} parent=75 // pred_fallthru
          _
      $region76: #{_qwen2_mlp_nd_impl.1} parent=5 // pred_fallthru
        _
    $region6: #{_qwen2_mlp_nd_impl.1} parent=1 // loop_footer
      %s28 = sadd.s32 1, %s24
    $region7: #{_qwen2_mlp_nd_impl.1} parent=1 // loop_footer_branch
      %23 = sbr.rel target = $region3
    $region8: #{_qwen2_mlp_nd_impl.1} parent=1 // loop_exit
      _
    %1742 = vsyncpa [#allocation4], 1
    %s1743 = scalar_lea.sflag [#allocation4], 1
    %1744 = vsyncpa %s1743, 1
    %1745 = vsyncpa [#allocation7], 1
    %s1746 = scalar_lea.sflag [#allocation7], 1
    %1747 = vsyncpa %s1746, 1
    %1748 = vsyncpa [#allocation10], 1
    %s1749 = scalar_lea.sflag [#allocation10], 1
    %1750 = vsyncpa %s1749, 1
    %1751 = vsyncpa [#allocation5], 1
    %s1752 = scalar_lea.sflag [#allocation5], 1
    %1753 = vsyncpa %s1752, 1

</llo_original>
